<compile_context>
chip_gen: v7x
topology: tpu7x:2x2x1
jax: 0.10.0
libtpu: 0.0.40
codegen_flags: <defaults>
</compile_context>

<pallas_src>
import functools

import jax
import jax.numpy as jnp
import numpy as np
from jax.experimental import pallas as pl
from jax.experimental.pallas import tpu as pltpu

_NEG_BIG = 1e30  # additive mask magnitude; exp(-1e30 - m) underflows to 0


def _gat_layer_kernel(num_heads, f_out, normalize,
                      x_ref, w_ref, bias_ref, maskb_ref, out_ref):
    """One fused GATConv layer for a single graph (grid step).

    x_ref     : (nodes, f_in)          input node features of this graph
    w_ref     : (f_in, hf + 2H)        [W | W_h@att_src_h | W_h@att_dst_h]
    bias_ref  : (1, hf)                output bias (concat layout)
    maskb_ref : (nodes, nodes) bf16    additive mask: 0 iff edge j->i, else -1e30
    out_ref   : (nodes, hf)            ReLU(attn-aggregated + bias) [, L2-norm]
    """
    hf = num_heads * f_out

    # Fused projection for all heads + attention-score columns (one MXU matmul).
    xp_aug = jnp.dot(x_ref[...], w_ref[...],
                     preferred_element_type=jnp.float32)      # (nodes, hf+2H)
    mask_bias = maskb_ref[...].astype(jnp.float32)            # (nodes, nodes)

    for h in range(num_heads):                                # H is tiny: unroll
        sl = slice(h * f_out, (h + 1) * f_out)
        xs = xp_aug[:, sl]                                    # (nodes, f_out)
        a_src = xp_aug[:, hf + h:hf + h + 1]                  # (nodes, 1)
        a_dst = xp_aug[:, hf + num_heads + h:hf + num_heads + h + 1]

        # logits[i, j] = a_dst[i] + a_src[j]  (message j -> i), LeakyReLU(0.2)
        logits = a_dst + a_src.T                              # (nodes, nodes)
        leaky = jnp.where(logits > 0, logits, 0.2 * logits)
        scores = leaky + mask_bias                            # additive mask

        # numerically-stable softmax over incoming edges; self loops guarantee
        # a finite row max so masked entries underflow to exactly 0
        m = jnp.max(scores, axis=-1, keepdims=True)
        e = jnp.exp(scores - m)
        denom = jnp.sum(e, axis=-1, keepdims=True)
        attn = e * pl.reciprocal(denom, approx=True)          # (nodes, nodes)

        # aggregation on the MXU (fp32 in / fp32 accum), fused bias + ReLU,
        # written directly into this head's output lane slice
        agg = jnp.dot(attn, xs, preferred_element_type=jnp.float32)
        out_ref[:, sl] = jnp.maximum(agg + bias_ref[:, sl], 0.0)

    if normalize:  # fused F.normalize(x, p=2, dim=-1) epilogue (last layer)
        y = out_ref[...]
        nrm = jnp.sqrt(jnp.sum(y * y, axis=-1, keepdims=True))
        out_ref[...] = y / jnp.maximum(nrm, 1e-12)


def gat_conv_layer(x3, w_aug, bias, mask_bias, *, num_heads, f_out, normalize):
    """Dense per-graph GATConv (concat=True) + fused bias/ReLU [+ L2 norm].

    x3        : (B, nodes, f_in) float32
    w_aug     : (f_in, H*f_out + 2H) float32 (attention vectors folded in)
    bias      : (H*f_out,) float32
    mask_bias : (B, nodes, nodes) bfloat16 additive mask (0 edge / -1e30 no edge)
    returns   : (B, nodes, H*f_out) float32, already ReLU'd (and normalized if
                `normalize`)
    """
    b, nodes, f_in = x3.shape
    hf = num_heads * f_out
    kaug = w_aug.shape[-1]

    kernel = functools.partial(_gat_layer_kernel, num_heads, f_out, normalize)
    return pl.pallas_call(
        kernel,
        out_shape=jax.ShapeDtypeStruct((b, nodes, hf), jnp.float32),
        grid=(b,),
        in_specs=[
            pl.BlockSpec((None, nodes, f_in), lambda g: (g, 0, 0)),   # x (this graph)
            pl.BlockSpec((f_in, kaug), lambda g: (0, 0)),             # augmented W
            pl.BlockSpec((1, hf), lambda g: (0, 0)),                  # bias
            pl.BlockSpec((None, nodes, nodes), lambda g: (g, 0, 0)),  # mask bias
        ],
        out_specs=pl.BlockSpec((None, nodes, hf), lambda g: (g, 0, 0)),
        compiler_params=pltpu.CompilerParams(
            dimension_semantics=("parallel",)),
    )(x3, w_aug, bias.reshape(1, hf), mask_bias)


def gat_model_forward(x, mask_bias, params, batch_size):
    """Equivalent of GATModel.forward.

    x         : (B, nodes_per_graph, input_dim)
    mask_bias : (B, nodes_per_graph, nodes_per_graph) additive mask (bf16),
                per-graph block of the block-diagonal batched adjacency.
    """
    h = x.astype(jnp.float32)
    n_layers = len(params)

    for li, layer in enumerate(params):
        w = layer["weight"]
        att_src = layer["att_src"]
        att_dst = layer["att_dst"]
        bias = layer["bias"]
        heads, f_out = att_src.shape

        # Fold the attention score vectors into the projection matmul:
        # a_src_j^h = x_j @ (W_h @ att_src_h), same for a_dst. Two tiny extra
        # MXU columns per head, computed once per layer outside the kernel.
        w_heads = w.reshape(w.shape[0], heads, f_out)
        wsrc = jnp.einsum('fhd,hd->fh', w_heads, att_src)     # (f_in, H)
        wdst = jnp.einsum('fhd,hd->fh', w_heads, att_dst)     # (f_in, H)
        w_aug = jnp.concatenate([w, wsrc, wdst], axis=1)      # (f_in, hf+2H)

        h = gat_conv_layer(h, w_aug, bias, mask_bias,
                           num_heads=heads, f_out=f_out,
                           normalize=(li == n_layers - 1))

    assert h.shape[0] == batch_size
    return h   # already (batch_size, nodes, out_dim), ReLU'd and L2-normalized


def make_params(key, input_dim, hidden_dim, output_dim, num_heads):
    """Deterministic parameter init matching GATConv shapes."""
    ks = jax.random.split(key, 8)

    def init(k, shape, scale=0.1):
        return (scale * jax.random.normal(k, shape)).astype(jnp.float32)

    layer1 = {
        "weight": init(ks[0], (input_dim, num_heads * hidden_dim)),
        "att_src": init(ks[1], (num_heads, hidden_dim)),
        "att_dst": init(ks[2], (num_heads, hidden_dim)),
        "bias": init(ks[3], (num_heads * hidden_dim,)),
    }
    layer2 = {
        "weight": init(ks[4], (num_heads * hidden_dim, output_dim)),
        "att_src": init(ks[5], (1, output_dim)),
        "att_dst": init(ks[6], (1, output_dim)),
        "bias": init(ks[7], (output_dim,)),
    }
    return [layer1, layer2]


def build_adjacency(batch_size, nodes_per_graph):
    """Ring graph per batch element (both directions) + self loops.

    Returns the per-graph additive mask bias (0 where edge j -> i, -1e30
    otherwise) in bfloat16, shape (B, nodes, nodes) — only the diagonal blocks
    of the batched block-diagonal adjacency are materialized — plus the dense
    edge_index (2, E) for reference.
    """
    adj = np.zeros((batch_size, nodes_per_graph, nodes_per_graph), dtype=np.float32)
    edges = []
    for g in range(batch_size):
        off = g * nodes_per_graph
        for v in range(nodes_per_graph):
            s, d = v, (v + 1) % nodes_per_graph
            adj[g, d, s] = 1.0          # message s -> d
            adj[g, s, d] = 1.0          # message d -> s
            edges.append((off + s, off + d))
            edges.append((off + d, off + s))
        for v in range(nodes_per_graph):
            adj[g, v, v] = 1.0          # add_self_loops=True (GATConv default)
    mask_bias = (adj - 1.0) * _NEG_BIG  # 0 where edge, -1e30 where not
    return (jnp.asarray(mask_bias, dtype=jnp.bfloat16),
            np.asarray(edges, dtype=np.int32).T)


if __name__ == "__main__":
    batch_size = 2
    nodes_per_graph = 16
    input_dim = 4
    hidden_dim = 8
    output_dim = 8
    num_heads = 2

    key = jax.random.PRNGKey(0)
    kx, kp = jax.random.split(key)

    x = jax.random.normal(
        kx, (batch_size, nodes_per_graph, input_dim), dtype=jnp.float32)
    mask_bias, edge_index = build_adjacency(batch_size, nodes_per_graph)
    params = make_params(kp, input_dim, hidden_dim, output_dim, num_heads)

    fwd = jax.jit(functools.partial(gat_model_forward, batch_size=batch_size))
    out = jax.block_until_ready(fwd(x, mask_bias, params))

    assert out.shape == (batch_size, nodes_per_graph, output_dim), out.shape
    assert bool(jnp.all(jnp.isfinite(out)))
    # rows are L2-normalized; sanity-check norms are ~1 (or 0 for all-zero rows)
    norms = jnp.linalg.norm(out, axis=-1)
    assert bool(jnp.all((jnp.abs(norms - 1.0) < 1e-3) | (norms < 1e-6)))
    print("KERNEL_OK")
</pallas_src>

<mosaic_0001>
module attributes {stable_mosaic.version = 11 : i64} {
  func.func @_gat_layer_kernel(%arg0: i32, %arg1: memref<1x16x4xf32, #tpu.memory_space<vmem>>, %arg2: memref<4x20xf32, #tpu.memory_space<vmem>>, %arg3: memref<1x16xf32, #tpu.memory_space<vmem>>, %arg4: memref<1x16x16xbf16, #tpu.memory_space<vmem>>, %arg5: memref<1x16x16xf32, #tpu.memory_space<vmem>>) attributes {dimension_semantics = [#tpu.dimension_semantics<parallel>], iteration_bounds = array<i64: 2>, scalar_prefetch = 0 : i64, scratch_operands = 0 : i64, tpu.core_type = #tpu.core_type<tc>, window_params = [{transform_indices = @transform_0, window_bounds = array<i64: 1, 16, 4>}, {pipeline_mode = #tpu.pipeline_mode<synchronous>, transform_indices = @transform_1, window_bounds = array<i64: 4, 20>}, {pipeline_mode = #tpu.pipeline_mode<synchronous>, transform_indices = @transform_2, window_bounds = array<i64: 1, 16>}, {transform_indices = @transform_3, window_bounds = array<i64: 1, 16, 16>}, {transform_indices = @transform_4, window_bounds = array<i64: 1, 16, 16>}]} {
    %c0 = arith.constant 0 : index
    %c0_0 = arith.constant 0 : index
    %c0_1 = arith.constant 0 : index
    %0 = vector.load %arg1[%c0, %c0_0, %c0_1] : memref<1x16x4xf32, #tpu.memory_space<vmem>>, vector<1x16x4xf32>
    %1 = vector.shape_cast %0 : vector<1x16x4xf32> to vector<16x4xf32>
    %c0_2 = arith.constant 0 : index
    %c0_3 = arith.constant 0 : index
    %2 = vector.load %arg2[%c0_2, %c0_3] : memref<4x20xf32, #tpu.memory_space<vmem>>, vector<4x20xf32>
    %cst = arith.constant dense<0.000000e+00> : vector<16x20xf32>
    %3 = tpu.matmul %1, %2, %cst {dimension_numbers = #tpu.dot_dimension_numbers<[1], [0], [0], [1], [0, 0, 1, 1], [], []>} : vector<16x4xf32>, vector<4x20xf32>, vector<16x20xf32> -> vector<16x20xf32>
    %c0_4 = arith.constant 0 : index
    %c0_5 = arith.constant 0 : index
    %c0_6 = arith.constant 0 : index
    %4 = vector.load %arg4[%c0_4, %c0_5, %c0_6] : memref<1x16x16xbf16, #tpu.memory_space<vmem>>, vector<1x16x16xbf16>
    %5 = vector.shape_cast %4 : vector<1x16x16xbf16> to vector<16x16xbf16>
    %6 = arith.extf %5 : vector<16x16xbf16> to vector<16x16xf32>
    %7 = vector.extract_strided_slice %3 {offsets = [0, 0], sizes = [16, 8], strides = [1, 1]} : vector<16x20xf32> to vector<16x8xf32>
    %8 = vector.extract_strided_slice %3 {offsets = [0, 16], sizes = [16, 1], strides = [1, 1]} : vector<16x20xf32> to vector<16x1xf32>
    %9 = vector.extract_strided_slice %3 {offsets = [0, 18], sizes = [16, 1], strides = [1, 1]} : vector<16x20xf32> to vector<16x1xf32>
    %10 = tpu.transpose %8, [1, 0] : vector<16x1xf32> -> vector<1x16xf32>
    %11 = vector.broadcast %9 : vector<16x1xf32> to vector<16x16xf32>
    %12 = vector.broadcast %10 : vector<1x16xf32> to vector<16x16xf32>
    %13 = arith.addf %11, %12 : vector<16x16xf32>
    %cst_7 = arith.constant 0.000000e+00 : f32
    %14 = vector.broadcast %cst_7 : f32 to vector<16x16xf32>
    %15 = arith.cmpf ogt, %13, %14 : vector<16x16xf32>
    %cst_8 = arith.constant 2.000000e-01 : f32
    %16 = vector.broadcast %cst_8 : f32 to vector<16x16xf32>
    %17 = arith.mulf %16, %13 : vector<16x16xf32>
    %18 = arith.select %15, %13, %17 : vector<16x16xi1>, vector<16x16xf32>
    %19 = arith.addf %18, %6 : vector<16x16xf32>
    %cst_9 = arith.constant dense<0xFF800000> : vector<16xf32>
    %20 = vector.multi_reduction <maximumf>, %19, %cst_9 [1] : vector<16x16xf32> to vector<16xf32>
    %21 = vector.shape_cast %20 : vector<16xf32> to vector<16x1xf32>
    %22 = vector.broadcast %21 : vector<16x1xf32> to vector<16x16xf32>
    %23 = arith.subf %19, %22 : vector<16x16xf32>
    %24 = math.exp %23 : vector<16x16xf32>
    %cst_10 = arith.constant dense<0.000000e+00> : vector<16xf32>
    %25 = vector.multi_reduction <add>, %24, %cst_10 [1] : vector<16x16xf32> to vector<16xf32>
    %26 = vector.shape_cast %25 : vector<16xf32> to vector<16x1xf32>
    %27 = tpu.reciprocal %26 {approx = true} : vector<16x1xf32> -> vector<16x1xf32>
    %28 = vector.broadcast %27 : vector<16x1xf32> to vector<16x16xf32>
    %29 = arith.mulf %24, %28 : vector<16x16xf32>
    %cst_11 = arith.constant dense<0.000000e+00> : vector<16x8xf32>
    %30 = tpu.matmul %29, %7, %cst_11 {dimension_numbers = #tpu.dot_dimension_numbers<[1], [0], [0], [1], [0, 0, 1, 1], [], []>} : vector<16x16xf32>, vector<16x8xf32>, vector<16x8xf32> -> vector<16x8xf32>
    %c0_12 = arith.constant 0 : index
    %c0_13 = arith.constant 0 : index
    %31 = vector.load %arg3[%c0_12, %c0_13] : memref<1x16xf32, #tpu.memory_space<vmem>>, vector<1x8xf32>
    %32 = vector.broadcast %31 : vector<1x8xf32> to vector<16x8xf32>
    %33 = arith.addf %30, %32 : vector<16x8xf32>
    %cst_14 = arith.constant 0.000000e+00 : f32
    %34 = vector.broadcast %cst_14 : f32 to vector<16x8xf32>
    %35 = arith.maximumf %33, %34 : vector<16x8xf32>
    %c0_15 = arith.constant 0 : index
    %c0_16 = arith.constant 0 : index
    %c0_17 = arith.constant 0 : index
    %36 = vector.load %arg5[%c0_15, %c0_16, %c0_17] : memref<1x16x16xf32, #tpu.memory_space<vmem>>, vector<1x16x8xf32>
    %37 = vector.shape_cast %36 : vector<1x16x8xf32> to vector<16x8xf32>
    %38 = vector.shape_cast %35 : vector<16x8xf32> to vector<1x16x8xf32>
    tpu.vector_store %arg5[%c0_15, %c0_16, %c0_17], %38 {strides = array<i32>} : memref<1x16x16xf32, #tpu.memory_space<vmem>>, vector<1x16x8xf32>,
    %39 = vector.extract_strided_slice %3 {offsets = [0, 8], sizes = [16, 8], strides = [1, 1]} : vector<16x20xf32> to vector<16x8xf32>
    %40 = vector.extract_strided_slice %3 {offsets = [0, 17], sizes = [16, 1], strides = [1, 1]} : vector<16x20xf32> to vector<16x1xf32>
    %41 = vector.extract_strided_slice %3 {offsets = [0, 19], sizes = [16, 1], strides = [1, 1]} : vector<16x20xf32> to vector<16x1xf32>
    %42 = tpu.transpose %40, [1, 0] : vector<16x1xf32> -> vector<1x16xf32>
    %43 = vector.broadcast %41 : vector<16x1xf32> to vector<16x16xf32>
    %44 = vector.broadcast %42 : vector<1x16xf32> to vector<16x16xf32>
    %45 = arith.addf %43, %44 : vector<16x16xf32>
    %cst_18 = arith.constant 0.000000e+00 : f32
    %46 = vector.broadcast %cst_18 : f32 to vector<16x16xf32>
    %47 = arith.cmpf ogt, %45, %46 : vector<16x16xf32>
    %cst_19 = arith.constant 2.000000e-01 : f32
    %48 = vector.broadcast %cst_19 : f32 to vector<16x16xf32>
    %49 = arith.mulf %48, %45 : vector<16x16xf32>
    %50 = arith.select %47, %45, %49 : vector<16x16xi1>, vector<16x16xf32>
    %51 = arith.addf %50, %6 : vector<16x16xf32>
    %cst_20 = arith.constant dense<0xFF800000> : vector<16xf32>
    %52 = vector.multi_reduction <maximumf>, %51, %cst_20 [1] : vector<16x16xf32> to vector<16xf32>
    %53 = vector.shape_cast %52 : vector<16xf32> to vector<16x1xf32>
    %54 = vector.broadcast %53 : vector<16x1xf32> to vector<16x16xf32>
    %55 = arith.subf %51, %54 : vector<16x16xf32>
    %56 = math.exp %55 : vector<16x16xf32>
    %cst_21 = arith.constant dense<0.000000e+00> : vector<16xf32>
    %57 = vector.multi_reduction <add>, %56, %cst_21 [1] : vector<16x16xf32> to vector<16xf32>
    %58 = vector.shape_cast %57 : vector<16xf32> to vector<16x1xf32>
    %59 = tpu.reciprocal %58 {approx = true} : vector<16x1xf32> -> vector<16x1xf32>
    %60 = vector.broadcast %59 : vector<16x1xf32> to vector<16x16xf32>
    %61 = arith.mulf %56, %60 : vector<16x16xf32>
    %cst_22 = arith.constant dense<0.000000e+00> : vector<16x8xf32>
    %62 = tpu.matmul %61, %39, %cst_22 {dimension_numbers = #tpu.dot_dimension_numbers<[1], [0], [0], [1], [0, 0, 1, 1], [], []>} : vector<16x16xf32>, vector<16x8xf32>, vector<16x8xf32> -> vector<16x8xf32>
    %c0_23 = arith.constant 0 : index
    %c8 = arith.constant 8 : index
    %63 = vector.load %arg3[%c0_23, %c8] : memref<1x16xf32, #tpu.memory_space<vmem>>, vector<1x8xf32>
    %64 = vector.broadcast %63 : vector<1x8xf32> to vector<16x8xf32>
    %65 = arith.addf %62, %64 : vector<16x8xf32>
    %cst_24 = arith.constant 0.000000e+00 : f32
    %66 = vector.broadcast %cst_24 : f32 to vector<16x8xf32>
    %67 = arith.maximumf %65, %66 : vector<16x8xf32>
    %c0_25 = arith.constant 0 : index
    %c0_26 = arith.constant 0 : index
    %c8_27 = arith.constant 8 : index
    %68 = vector.load %arg5[%c0_25, %c0_26, %c8_27] : memref<1x16x16xf32, #tpu.memory_space<vmem>>, vector<1x16x8xf32>
    %69 = vector.shape_cast %68 : vector<1x16x8xf32> to vector<16x8xf32>
    %70 = vector.shape_cast %67 : vector<16x8xf32> to vector<1x16x8xf32>
    tpu.vector_store %arg5[%c0_25, %c0_26, %c8_27], %70 {strides = array<i32>} : memref<1x16x16xf32, #tpu.memory_space<vmem>>, vector<1x16x8xf32>,
    return
  }
  func.func @transform_0(%arg0: i32) -> (i32, i32, i32) {
    %c0_i32 = arith.constant 0 : i32
    %c0_i32_0 = arith.constant 0 : i32
    %c0_i32_1 = arith.constant 0 : i32
    return %arg0, %c0_i32, %c0_i32_0 : i32, i32, i32
  }
  func.func @transform_1(%arg0: i32) -> (i32, i32) {
    %c0_i32 = arith.constant 0 : i32
    %c0_i32_0 = arith.constant 0 : i32
    %c0_i32_1 = arith.constant 0 : i32
    return %c0_i32, %c0_i32_0 : i32, i32
  }
  func.func @transform_2(%arg0: i32) -> (i32, i32) {
    %c0_i32 = arith.constant 0 : i32
    %c0_i32_0 = arith.constant 0 : i32
    %c0_i32_1 = arith.constant 0 : i32
    return %c0_i32, %c0_i32_0 : i32, i32
  }
  func.func @transform_3(%arg0: i32) -> (i32, i32, i32) {
    %c0_i32 = arith.constant 0 : i32
    %c0_i32_0 = arith.constant 0 : i32
    %c0_i32_1 = arith.constant 0 : i32
    return %arg0, %c0_i32, %c0_i32_0 : i32, i32, i32
  }
  func.func @transform_4(%arg0: i32) -> (i32, i32, i32) {
    %c0_i32 = arith.constant 0 : i32
    %c0_i32_0 = arith.constant 0 : i32
    %c0_i32_1 = arith.constant 0 : i32
    return %arg0, %c0_i32, %c0_i32_0 : i32, i32, i32
  }
}

module attributes {stable_mosaic.version = 11 : i64} {
  func.func @_gat_layer_kernel(%arg0: i32, %arg1: memref<1x16x16xf32, #tpu.memory_space<vmem>>, %arg2: memref<16x10xf32, #tpu.memory_space<vmem>>, %arg3: memref<1x8xf32, #tpu.memory_space<vmem>>, %arg4: memref<1x16x16xbf16, #tpu.memory_space<vmem>>, %arg5: memref<1x16x8xf32, #tpu.memory_space<vmem>>) attributes {dimension_semantics = [#tpu.dimension_semantics<parallel>], iteration_bounds = array<i64: 2>, scalar_prefetch = 0 : i64, scratch_operands = 0 : i64, tpu.core_type = #tpu.core_type<tc>, window_params = [{transform_indices = @transform_0, window_bounds = array<i64: 1, 16, 16>}, {pipeline_mode = #tpu.pipeline_mode<synchronous>, transform_indices = @transform_1, window_bounds = array<i64: 16, 10>}, {pipeline_mode = #tpu.pipeline_mode<synchronous>, transform_indices = @transform_2, window_bounds = array<i64: 1, 8>}, {transform_indices = @transform_3, window_bounds = array<i64: 1, 16, 16>}, {transform_indices = @transform_4, window_bounds = array<i64: 1, 16, 8>}]} {
    %c0 = arith.constant 0 : index
    %c0_0 = arith.constant 0 : index
    %c0_1 = arith.constant 0 : index
    %0 = vector.load %arg1[%c0, %c0_0, %c0_1] : memref<1x16x16xf32, #tpu.memory_space<vmem>>, vector<1x16x16xf32>
    %1 = vector.shape_cast %0 : vector<1x16x16xf32> to vector<16x16xf32>
    %c0_2 = arith.constant 0 : index
    %c0_3 = arith.constant 0 : index
    %2 = vector.load %arg2[%c0_2, %c0_3] : memref<16x10xf32, #tpu.memory_space<vmem>>, vector<16x10xf32>
    %cst = arith.constant dense<0.000000e+00> : vector<16x10xf32>
    %3 = tpu.matmul %1, %2, %cst {dimension_numbers = #tpu.dot_dimension_numbers<[1], [0], [0], [1], [0, 0, 1, 1], [], []>} : vector<16x16xf32>, vector<16x10xf32>, vector<16x10xf32> -> vector<16x10xf32>
    %c0_4 = arith.constant 0 : index
    %c0_5 = arith.constant 0 : index
    %c0_6 = arith.constant 0 : index
    %4 = vector.load %arg4[%c0_4, %c0_5, %c0_6] : memref<1x16x16xbf16, #tpu.memory_space<vmem>>, vector<1x16x16xbf16>
    %5 = vector.shape_cast %4 : vector<1x16x16xbf16> to vector<16x16xbf16>
    %6 = arith.extf %5 : vector<16x16xbf16> to vector<16x16xf32>
    %7 = vector.extract_strided_slice %3 {offsets = [0, 0], sizes = [16, 8], strides = [1, 1]} : vector<16x10xf32> to vector<16x8xf32>
    %8 = vector.extract_strided_slice %3 {offsets = [0, 8], sizes = [16, 1], strides = [1, 1]} : vector<16x10xf32> to vector<16x1xf32>
    %9 = vector.extract_strided_slice %3 {offsets = [0, 9], sizes = [16, 1], strides = [1, 1]} : vector<16x10xf32> to vector<16x1xf32>
    %10 = tpu.transpose %8, [1, 0] : vector<16x1xf32> -> vector<1x16xf32>
    %11 = vector.broadcast %9 : vector<16x1xf32> to vector<16x16xf32>
    %12 = vector.broadcast %10 : vector<1x16xf32> to vector<16x16xf32>
    %13 = arith.addf %11, %12 : vector<16x16xf32>
    %cst_7 = arith.constant 0.000000e+00 : f32
    %14 = vector.broadcast %cst_7 : f32 to vector<16x16xf32>
    %15 = arith.cmpf ogt, %13, %14 : vector<16x16xf32>
    %cst_8 = arith.constant 2.000000e-01 : f32
    %16 = vector.broadcast %cst_8 : f32 to vector<16x16xf32>
    %17 = arith.mulf %16, %13 : vector<16x16xf32>
    %18 = arith.select %15, %13, %17 : vector<16x16xi1>, vector<16x16xf32>
    %19 = arith.addf %18, %6 : vector<16x16xf32>
    %cst_9 = arith.constant dense<0xFF800000> : vector<16xf32>
    %20 = vector.multi_reduction <maximumf>, %19, %cst_9 [1] : vector<16x16xf32> to vector<16xf32>
    %21 = vector.shape_cast %20 : vector<16xf32> to vector<16x1xf32>
    %22 = vector.broadcast %21 : vector<16x1xf32> to vector<16x16xf32>
    %23 = arith.subf %19, %22 : vector<16x16xf32>
    %24 = math.exp %23 : vector<16x16xf32>
    %cst_10 = arith.constant dense<0.000000e+00> : vector<16xf32>
    %25 = vector.multi_reduction <add>, %24, %cst_10 [1] : vector<16x16xf32> to vector<16xf32>
    %26 = vector.shape_cast %25 : vector<16xf32> to vector<16x1xf32>
    %27 = tpu.reciprocal %26 {approx = true} : vector<16x1xf32> -> vector<16x1xf32>
    %28 = vector.broadcast %27 : vector<16x1xf32> to vector<16x16xf32>
    %29 = arith.mulf %24, %28 : vector<16x16xf32>
    %cst_11 = arith.constant dense<0.000000e+00> : vector<16x8xf32>
    %30 = tpu.matmul %29, %7, %cst_11 {dimension_numbers = #tpu.dot_dimension_numbers<[1], [0], [0], [1], [0, 0, 1, 1], [], []>} : vector<16x16xf32>, vector<16x8xf32>, vector<16x8xf32> -> vector<16x8xf32>
    %c0_12 = arith.constant 0 : index
    %c0_13 = arith.constant 0 : index
    %31 = vector.load %arg3[%c0_12, %c0_13] : memref<1x8xf32, #tpu.memory_space<vmem>>, vector<1x8xf32>
    %32 = vector.broadcast %31 : vector<1x8xf32> to vector<16x8xf32>
    %33 = arith.addf %30, %32 : vector<16x8xf32>
    %cst_14 = arith.constant 0.000000e+00 : f32
    %34 = vector.broadcast %cst_14 : f32 to vector<16x8xf32>
    %35 = arith.maximumf %33, %34 : vector<16x8xf32>
    %c0_15 = arith.constant 0 : index
    %c0_16 = arith.constant 0 : index
    %c0_17 = arith.constant 0 : index
    %36 = vector.load %arg5[%c0_15, %c0_16, %c0_17] : memref<1x16x8xf32, #tpu.memory_space<vmem>>, vector<1x16x8xf32>
    %37 = vector.shape_cast %36 : vector<1x16x8xf32> to vector<16x8xf32>
    %38 = vector.shape_cast %35 : vector<16x8xf32> to vector<1x16x8xf32>
    tpu.vector_store %arg5[%c0_15, %c0_16, %c0_17], %38 {strides = array<i32>} : memref<1x16x8xf32, #tpu.memory_space<vmem>>, vector<1x16x8xf32>,
    %c0_18 = arith.constant 0 : index
    %c0_19 = arith.constant 0 : index
    %c0_20 = arith.constant 0 : index
    %39 = vector.load %arg5[%c0_18, %c0_19, %c0_20] : memref<1x16x8xf32, #tpu.memory_space<vmem>>, vector<1x16x8xf32>
    %40 = vector.shape_cast %39 : vector<1x16x8xf32> to vector<16x8xf32>
    %41 = arith.mulf %40, %40 : vector<16x8xf32>
    %cst_21 = arith.constant dense<0.000000e+00> : vector<16xf32>
    %42 = vector.multi_reduction <add>, %41, %cst_21 [1] : vector<16x8xf32> to vector<16xf32>
    %43 = vector.shape_cast %42 : vector<16xf32> to vector<16x1xf32>
    %44 = math.sqrt %43 : vector<16x1xf32>
    %cst_22 = arith.constant 9.99999996E-13 : f32
    %45 = vector.broadcast %cst_22 : f32 to vector<16x1xf32>
    %46 = arith.maximumf %44, %45 : vector<16x1xf32>
    %47 = vector.broadcast %46 : vector<16x1xf32> to vector<16x8xf32>
    %48 = arith.divf %40, %47 : vector<16x8xf32>
    %c0_23 = arith.constant 0 : index
    %c0_24 = arith.constant 0 : index
    %c0_25 = arith.constant 0 : index
    %49 = vector.load %arg5[%c0_23, %c0_24, %c0_25] : memref<1x16x8xf32, #tpu.memory_space<vmem>>, vector<1x16x8xf32>
    %50 = vector.shape_cast %49 : vector<1x16x8xf32> to vector<16x8xf32>
    %51 = vector.shape_cast %48 : vector<16x8xf32> to vector<1x16x8xf32>
    tpu.vector_store %arg5[%c0_23, %c0_24, %c0_25], %51 {strides = array<i32>} : memref<1x16x8xf32, #tpu.memory_space<vmem>>, vector<1x16x8xf32>,
    return
  }
  func.func @transform_0(%arg0: i32) -> (i32, i32, i32) {
    %c0_i32 = arith.constant 0 : i32
    %c0_i32_0 = arith.constant 0 : i32
    %c0_i32_1 = arith.constant 0 : i32
    return %arg0, %c0_i32, %c0_i32_0 : i32, i32, i32
  }
  func.func @transform_1(%arg0: i32) -> (i32, i32) {
    %c0_i32 = arith.constant 0 : i32
    %c0_i32_0 = arith.constant 0 : i32
    %c0_i32_1 = arith.constant 0 : i32
    return %c0_i32, %c0_i32_0 : i32, i32
  }
  func.func @transform_2(%arg0: i32) -> (i32, i32) {
    %c0_i32 = arith.constant 0 : i32
    %c0_i32_0 = arith.constant 0 : i32
    %c0_i32_1 = arith.constant 0 : i32
    return %c0_i32, %c0_i32_0 : i32, i32
  }
  func.func @transform_3(%arg0: i32) -> (i32, i32, i32) {
    %c0_i32 = arith.constant 0 : i32
    %c0_i32_0 = arith.constant 0 : i32
    %c0_i32_1 = arith.constant 0 : i32
    return %arg0, %c0_i32, %c0_i32_0 : i32, i32, i32
  }
  func.func @transform_4(%arg0: i32) -> (i32, i32, i32) {
    %c0_i32 = arith.constant 0 : i32
    %c0_i32_0 = arith.constant 0 : i32
    %c0_i32_1 = arith.constant 0 : i32
    return %arg0, %c0_i32, %c0_i32_0 : i32, i32, i32
  }
}

</mosaic_0001>

<llo_original>
// kernel: gat_model_forward.3
$region0: #{gat_model_forward.3}
  #allocation0 [shape = 'u32[]', space=smem, size = 0x4, offset = 0x4, fixed_abs, tag = 'smem constant byte address 0x4 - core index']
  #allocation1 [shape = 'u32[144,128]{1,0:T(1,128)}', space=vmem, size = 0x12000, scoped, tag = 'internal scratch']
  %s0 = inlined_call_operand.vmem [shape: f32[2,16,16], index: 0, kind: input, shape index: {}]
  %s1 = inlined_call_operand.vmem [shape: f32[16,10], index: 1, kind: input, shape index: {}]
  %s2 = inlined_call_operand.vmem [shape: f32[1,8], index: 2, kind: input, shape index: {}]
  %s3 = inlined_call_operand.vmem [shape: bf16[2,16,16], index: 3, kind: input, shape index: {}]
  %s4 = inlined_call_operand.vmem [shape: f32[2,16,8], index: 4, kind: output, shape index: {}]
  %s5 = sld [smem:[#allocation0]]
  $region49: #{gat_model_forward.3} parent=0
    _
  %s7 = ssub.s32 1, %s5
  %s8 = scalar_select 0, %s7, %s5
  loop: start=0, step=1, limit=4
  $region2: #{gat_model_forward.3} parent=0 // loop_pre_header
    _
  $region3: #{gat_model_forward.3} parent=0 // loop_header
    %s10 = sphi 0, %s14
    %p11 = scmp.ge.s32.totalorder %s10, 4
    %s20 = sphi 0, %s22
    %s23 = sphi 0, %s20
    %s24 = sphi 0, %s23
    %s40 = sphi 0, %s24
    %s44 = sphi 0, %s44
    %s46 = sphi 0, %s44
    %s47 = sphi 0, %s46
    %s61 = sphi 0, %s47
    %s65 = sphi 0, %s65
    %s67 = sphi 0, %s65
    %s68 = sphi 0, %s67
    %s82 = sphi 0, %s68
    %s88 = sphi 0, %s90
    %s91 = sphi 0, %s88
    %s92 = sphi 0, %s91
    %s108 = sphi 0, %s92
    %s114 = sphi 0, %s116
    %s117 = sphi 0, %s114
    %s118 = sphi 0, %s117
    %s134 = sphi 0, %s118
  $region4: #{gat_model_forward.3} parent=0 // loop_header_branch
    %13 = sbr.rel (%p11) target = $region8
  $region5: #{gat_model_forward.3} parent=0 // loop_body
    %s15 = ssub.s32 %s10, 1
    %s16 = ssub.s32 %s10, 2
    %s17 = sadd.s32 %s10, 1
    %s18 = ssub.s32 %s10, %s17
    %p19 = scmp.eq.s32.totalorder %s18, 0
    %s21 = sadd.s32 %s20, 1
    %s22 = scalar_select %p19, %s20, %s21
    %p25 = pneg %p19
    %p26 = scmp.eq.s32.totalorder %s10, 1
    %p27 = por %p25, %p26
    %p28 = scmp.ne.s32.totalorder %s20, %s23
    %p29 = scmp.eq.s32.totalorder %s10, 0
    %p30 = por %p28, %p29
    %p31 = scmp.ne.s32.totalorder %s20, %s23
    %p32 = scmp.eq.s32.totalorder %s15, 1
    %p33 = por %p31, %p32
    %p34 = scmp.ne.s32.totalorder %s23, %s24
    %p35 = scmp.eq.s32.totalorder %s15, 0
    %p36 = por %p34, %p35
    %p37 = scmp.ne.s32.totalorder %s23, %s24
    %p38 = scmp.eq.s32.totalorder %s16, 1
    %p39 = por %p37, %p38
    %p41 = scmp.ne.s32.totalorder %s24, %s40
    %p42 = scmp.eq.s32.totalorder %s16, 0
    %p43 = por %p41, %p42
    %s45 = sadd.s32 %s44, 1
    %p48 = scmp.eq.s32.totalorder %s10, 1
    %p49 = scmp.ne.s32.totalorder %s44, %s46
    %p50 = scmp.eq.s32.totalorder %s10, 0
    %p51 = por %p49, %p50
    %p52 = scmp.ne.s32.totalorder %s44, %s46
    %p53 = scmp.eq.s32.totalorder %s15, 1
    %p54 = por %p52, %p53
    %p55 = scmp.ne.s32.totalorder %s46, %s47
    %p56 = scmp.eq.s32.totalorder %s15, 0
    %p57 = por %p55, %p56
    %p58 = scmp.ne.s32.totalorder %s46, %s47
    %p59 = scmp.eq.s32.totalorder %s16, 1
    %p60 = por %p58, %p59
    %p62 = scmp.ne.s32.totalorder %s47, %s61
    %p63 = scmp.eq.s32.totalorder %s16, 0
    %p64 = por %p62, %p63
    %s66 = sadd.s32 %s65, 1
    %p69 = scmp.eq.s32.totalorder %s10, 1
    %p70 = scmp.ne.s32.totalorder %s65, %s67
    %p71 = scmp.eq.s32.totalorder %s10, 0
    %p72 = por %p70, %p71
    %p73 = scmp.ne.s32.totalorder %s65, %s67
    %p74 = scmp.eq.s32.totalorder %s15, 1
    %p75 = por %p73, %p74
    %p76 = scmp.ne.s32.totalorder %s67, %s68
    %p77 = scmp.eq.s32.totalorder %s15, 0
    %p78 = por %p76, %p77
    %p79 = scmp.ne.s32.totalorder %s67, %s68
    %p80 = scmp.eq.s32.totalorder %s16, 1
    %p81 = por %p79, %p80
    %p83 = scmp.ne.s32.totalorder %s68, %s82
    %p84 = scmp.eq.s32.totalorder %s16, 0
    %p85 = por %p83, %p84
    %s86 = ssub.s32 %s10, %s17
    %p87 = scmp.eq.s32.totalorder %s86, 0
    %s89 = sadd.s32 %s88, 1
    %s90 = scalar_select %p87, %s88, %s89
    %p93 = pneg %p87
    %p94 = scmp.eq.s32.totalorder %s10, 1
    %p95 = por %p93, %p94
    %p96 = scmp.ne.s32.totalorder %s88, %s91
    %p97 = scmp.eq.s32.totalorder %s10, 0
    %p98 = por %p96, %p97
    %p99 = scmp.ne.s32.totalorder %s88, %s91
    %p100 = scmp.eq.s32.totalorder %s15, 1
    %p101 = por %p99, %p100
    %p102 = scmp.ne.s32.totalorder %s91, %s92
    %p103 = scmp.eq.s32.totalorder %s15, 0
    %p104 = por %p102, %p103
    %p105 = scmp.ne.s32.totalorder %s91, %s92
    %p106 = scmp.eq.s32.totalorder %s16, 1
    %p107 = por %p105, %p106
    %p109 = scmp.ne.s32.totalorder %s92, %s108
    %p110 = scmp.eq.s32.totalorder %s16, 0
    %p111 = por %p109, %p110
    %s112 = ssub.s32 %s10, %s17
    %p113 = scmp.eq.s32.totalorder %s112, 0
    %s115 = sadd.s32 %s114, 1
    %s116 = scalar_select %p113, %s114, %s115
    %p119 = pneg %p113
    %p120 = scmp.eq.s32.totalorder %s10, 1
    %p121 = por %p119, %p120
    %p122 = scmp.ne.s32.totalorder %s114, %s117
    %p123 = scmp.eq.s32.totalorder %s10, 0
    %p124 = por %p122, %p123
    %p125 = scmp.ne.s32.totalorder %s114, %s117
    %p126 = scmp.eq.s32.totalorder %s15, 1
    %p127 = por %p125, %p126
    %p128 = scmp.ne.s32.totalorder %s117, %s118
    %p129 = scmp.eq.s32.totalorder %s15, 0
    %p130 = por %p128, %p129
    %p131 = scmp.ne.s32.totalorder %s117, %s118
    %p132 = scmp.eq.s32.totalorder %s16, 1
    %p133 = por %p131, %p132
    %p135 = scmp.ne.s32.totalorder %s118, %s134
    %p136 = scmp.eq.s32.totalorder %s16, 0
    %p137 = por %p135, %p136
    %p138 = scmp.le.s32.totalorder 1, %s10
    %p139 = scmp.lt.s32.totalorder %s10, 3
    %p140 = pnand %p138, %p139
    %p141 = pneg %p140
    // Predicated region
    $region9: #{gat_model_forward.3} parent=5 // pred_check
      _
    $region10: #{gat_model_forward.3} parent=5 // pred_check_branch
      %143 = sbr.rel (%p140) target = $region12
    $region11: #{gat_model_forward.3} parent=5 // pred_region
      %s144 = ssub.s32 %s10, 1
      // Predicated region
      $region13: #{gat_model_forward.3} parent=11 // pred_check
        %p145 = pneg %p57
      $region14: #{gat_model_forward.3} parent=11 // pred_check_branch
        %147 = sbr.rel (%p145) target = $region16
      $region15: #{gat_model_forward.3} parent=11 // pred_region
        _
      $region16: #{gat_model_forward.3} parent=11 // pred_fallthru
        _
      // Predicated region
      $region17: #{gat_model_forward.3} parent=11 // pred_check
        %p148 = pneg %p78
      $region18: #{gat_model_forward.3} parent=11 // pred_check_branch
        %150 = sbr.rel (%p148) target = $region20
      $region19: #{gat_model_forward.3} parent=11 // pred_region
        _
      $region20: #{gat_model_forward.3} parent=11 // pred_fallthru
        _
    $region12: #{gat_model_forward.3} parent=5 // pred_fallthru
      _
    %p151 = scmp.lt.s32.totalorder %s10, 2
    // Predicated region
    $region21: #{gat_model_forward.3} parent=5 // pred_check
      %p152 = pneg %p151
    $region22: #{gat_model_forward.3} parent=5 // pred_check_branch
      %154 = sbr.rel (%p152) target = $region24
    $region23: #{gat_model_forward.3} parent=5 // pred_region
      // Predicated region
      $region25: #{gat_model_forward.3} parent=23 // pred_check
        %p155 = pneg %p30
      $region26: #{gat_model_forward.3} parent=23 // pred_check_branch
        %157 = sbr.rel (%p155) target = $region28
      $region27: #{gat_model_forward.3} parent=23 // pred_region
        %p158 = scmp.lt.s32.totalorder %s10, 1
        %s159 = scalar_select %p158, %s10, 1
        %s160 = smul.addr %s159, 2
        %s161 = smul.addr %s160, 8
        %s162 = scalar_lea.vmem %s0, %s161
      $region28: #{gat_model_forward.3} parent=23 // pred_fallthru
        _
      // Predicated region
      $region29: #{gat_model_forward.3} parent=23 // pred_check
        %p163 = pneg %p98
      $region30: #{gat_model_forward.3} parent=23 // pred_check_branch
        %165 = sbr.rel (%p163) target = $region32
      $region31: #{gat_model_forward.3} parent=23 // pred_region
        %p166 = scmp.lt.s32.totalorder %s10, 1
        %s167 = scalar_select %p166, %s10, 1
        %s168 = smul.addr %s167, 2
        %s169 = smul.addr %s168, 4
        %s170 = scalar_lea.vmem %s3, %s169
      $region32: #{gat_model_forward.3} parent=23 // pred_fallthru
        _
    $region24: #{gat_model_forward.3} parent=5 // pred_fallthru
      _
    %p171 = scmp.le.s32.totalorder 1, %s10
    %p172 = scmp.lt.s32.totalorder %s10, 3
    %p173 = pnand %p171, %p172
    %p174 = pneg %p173
    // Predicated region
    $region33: #{gat_model_forward.3} parent=5 // pred_check
      _
    $region34: #{gat_model_forward.3} parent=5 // pred_check_branch
      %176 = sbr.rel (%p173) target = $region36
    $region35: #{gat_model_forward.3} parent=5 // pred_region
      %s177 = ssub.s32 %s10, 1
      %p178 = scmp.lt.s32.totalorder %s15, 1
      %s179 = scalar_select %p178, %s15, 1
      %s180 = smul.addr %s179, 2
      %s181 = smul.addr %s180, 8
      %s182 = scalar_lea.vmem %s0, %s181
      %p183 = pneg %p36
      %p184 = pneg %p33
      %p185 = pneg %p57
      %p186 = pneg %p54
      %p187 = pneg %p78
      %p188 = pneg %p75
      %p189 = scmp.lt.s32.totalorder %s15, 1
      %s190 = scalar_select %p189, %s15, 1
      %s191 = smul.addr %s190, 2
      %s192 = smul.addr %s191, 4
      %s193 = scalar_lea.vmem %s3, %s192
      %p194 = pneg %p104
      %p195 = pneg %p101
      %p196 = pneg %p130
      %p197 = pneg %p127
      %p198 = scmp.lt.s32.totalorder %s15, 1
      %s199 = scalar_select %p198, %s15, 1
      %s200 = smul.addr %s199, 2
      %s201 = smul.addr %s200, 8
      %s202 = scalar_lea.vmem %s4, %s201
      %p203 = scmp.lt.s32.totalorder %s15, 1
      %s204 = scalar_select %p203, %s15, 1
      %s205 = smul.addr %s204, 2
      %s206 = smul.addr %s205, 8
      %s207 = scalar_lea.vmem %s0, %s206
      %p208 = scmp.lt.s32.totalorder %s15, 1
      %s209 = scalar_select %p208, %s15, 1
      %s210 = smul.addr %s209, 2
      %s211 = smul.addr %s210, 4
      %s212 = scalar_lea.vmem %s3, %s211
      %p213 = scmp.lt.s32.totalorder %s15, 1
      %s214 = scalar_select %p213, %s15, 1
      %s215 = smul.addr %s214, 2
      %s216 = smul.addr %s215, 8
      %s217 = scalar_lea.vmem %s4, %s216
      %v218 = vld [vmem:[%s207] sm:$0xff]
      %v219 = vld [vmem:[%s207 + $0x8] sm:$0xff]
      %v220 = vld [vmem:[%s1] sm:$0xff]
      %v221 = vld [vmem:[%s1 + $0x8] sm:$0xff]
      %vm222 = vcmask 130048
      %v224 = vsel %vm222, %v218, 0
      %v227 = vsel %vm222, %v219, 0
      %229 = vmatprep.subr.mxu0 0.0
      %230 = vmatpush1.msra.mxu0 %v220
      %231 = vmatprep.subr.mxu0 0.0
      %232 = vmatpush1.msra.mxu0 %v221
      %233 = vmatprep.subr.mxu0 0.0
      %234 = vmatpush1.msra.mxu0 0.0
      %235 = vmatprep.subr.mxu0 0.0
      %236 = vmatpush1.msra.mxu0 0.0
      %237 = vmatprep.subr.mxu0 0.0
      %238 = vmatpush1.msra.mxu0 0.0
      %239 = vmatprep.subr.mxu0 0.0
      %240 = vmatpush1.msra.mxu0 0.0
      %241 = vmatprep.subr.mxu0 0.0
      %242 = vmatpush1.msra.mxu0 0.0
      %243 = vmatprep.subr.mxu0 0.0
      %244 = vmatpush1.msra.mxu0 0.0
      %245 = vmatprep.subr.mxu0 0.0
      %246 = vmatpush1.msra.mxu0 0.0
      %247 = vmatprep.subr.mxu0 0.0
      %248 = vmatpush1.msra.mxu0 0.0
      %249 = vmatprep.subr.mxu0 0.0
      %250 = vmatpush1.msra.mxu0 0.0
      %251 = vmatprep.subr.mxu0 0.0
      %252 = vmatpush1.msra.mxu0 0.0
      %253 = vmatprep.subr.mxu0 0.0
      %254 = vmatpush1.msra.mxu0 0.0
      %255 = vmatprep.subr.mxu0 0.0
      %256 = vmatpush1.msra.mxu0 0.0
      %257 = vmatprep.subr.mxu0 0.0
      %258 = vmatpush1.msra.mxu0 0.0
      %259 = vmatprep.subr.mxu0 0.0
      %260 = vmatpush1.msra.mxu0 0.0
      %261 = vmatprep.subr.mxu0 0.0
      %262 = vmatpush1.msra.mxu0 0.0
      %263 = vmatprep.subr.mxu0 0.0
      %264 = vmatpush1.msra.mxu0 0.0
      %265 = vmatprep.subr.mxu0 0.0
      %266 = vmatpush1.msra.mxu0 0.0
      %267 = vmatprep.subr.mxu0 0.0
      %268 = vmatpush1.msra.mxu0 0.0
      %269 = vmatprep.subr.mxu0 0.0
      %270 = vmatpush1.msra.mxu0 0.0
      %271 = vmatprep.subr.mxu0 0.0
      %272 = vmatpush1.msra.mxu0 0.0
      %273 = vmatprep.subr.mxu0 0.0
      %274 = vmatpush1.msra.mxu0 0.0
      %275 = vmatprep.subr.mxu0 0.0
      %276 = vmatpush1.msra.mxu0 0.0
      %277 = vmatprep.subr.mxu0 0.0
      %278 = vmatpush1.msra.mxu0 0.0
      %279 = vmatprep.subr.mxu0 0.0
      %280 = vmatpush1.msra.mxu0 0.0
      %281 = vmatprep.subr.mxu0 0.0
      %282 = vmatpush1.msra.mxu0 0.0
      %283 = vmatprep.subr.mxu0 0.0
      %284 = vmatpush1.msra.mxu0 0.0
      %285 = vmatprep.subr.mxu0 0.0
      %286 = vmatpush1.msra.mxu0 0.0
      %287 = vmatprep.subr.mxu0 0.0
      %288 = vmatpush1.msra.mxu0 0.0
      %289 = vmatprep.subr.mxu0 0.0
      %290 = vmatpush1.msra.mxu0 0.0
      %291 = vmatprep.subr.mxu0 0.0
      %292 = vmatpush1.msra.mxu0 0.0
      %293 = vmatprep.mubr.f32.mxu0 0.0
      %294 = vmatmul.mubr.f32.gmra.mrb[0].mxu0 %v224
      %v295 = vpop.f32.mrb[0].mxu0
      %v296 = vadd.f32 0.0, %v295
      %v297 = vpop.f32.mrb[0].mxu0
      %298 = vmatprep.mubr.f32.mxu0 0.0
      %299 = vmatmul.mubr.f32.gmra.mrb[0].mxu0 %v227
      %v300 = vpop.f32.mrb[0].mxu0
      %v301 = vadd.f32 0.0, %v300
      %v302 = vpop.f32.mrb[0].mxu0
      %303 = vdwg.mxu0
      %v304 = vld [vmem:[%s212] sm:$0xf]
      %v305 = vld [vmem:[%s212 + $0x4] sm:$0xf]
      %v306 = vunpack.c.l.bf16 %v304
      %v307 = vunpack.c.l.bf16 %v305
      %310 = vrot.lane.b32.xlu0 %v296, 120
      %v311 = vpop.permute.xlu0 %310
      %312 = vrot.lane.b32.xlu0 %v301, 120
      %v313 = vpop.permute.xlu0 %312
      %316 = vxpose.xlu0.b32.start [1/16] %v311, 128
      %317 = vxpose.xlu0.b32.cont [2/16] %v313, 128
      %318 = vxpose.xlu0.b32.cont [3/16] 0.0, 128
      %319 = vxpose.xlu0.b32.cont [4/16] 0.0, 128
      %320 = vxpose.xlu0.b32.cont [5/16] 0.0, 128
      %321 = vxpose.xlu0.b32.cont [6/16] 0.0, 128
      %322 = vxpose.xlu0.b32.cont [7/16] 0.0, 128
      %323 = vxpose.xlu0.b32.cont [8/16] 0.0, 128
      %324 = vxpose.xlu0.b32.cont [9/16] 0.0, 128
      %325 = vxpose.xlu0.b32.cont [10/16] 0.0, 128
      %326 = vxpose.xlu0.b32.cont [11/16] 0.0, 128
      %327 = vxpose.xlu0.b32.cont [12/16] 0.0, 128
      %328 = vxpose.xlu0.b32.cont [13/16] 0.0, 128
      %329 = vxpose.xlu0.b32.cont [14/16] 0.0, 128
      %330 = vxpose.xlu0.b32.cont [15/16] 0.0, 128
      %331 = vxpose.xlu0.b32.end [16/16] 0.0, 128
      %v332 = vpop.trf.xlu0
      %v333 = vpop.trf.xlu0
      %v334 = vpop.trf.xlu0
      %v335 = vpop.trf.xlu0
      %v336 = vpop.trf.xlu0
      %v337 = vpop.trf.xlu0
      %v338 = vpop.trf.xlu0
      %v339 = vpop.trf.xlu0
      %v340 = vpop.trf.xlu0
      %v341 = vpop.trf.xlu0
      %v342 = vpop.trf.xlu0
      %v343 = vpop.trf.xlu0
      %v344 = vpop.trf.xlu0
      %v345 = vpop.trf.xlu0
      %v346 = vpop.trf.xlu0
      %v347 = vpop.trf.xlu0
      %348 = vset.pattern.permute.xlu0 9
      %349 = vperm.xlu0 %348, %v296
      %v350 = vpop.permute.xlu0 %349
      %352 = vset.pattern.permute.xlu0 9
      %353 = vperm.xlu0 %352, %v301
      %v354 = vpop.permute.xlu0 %353
      %v356 = vlaneseq
      %v357 = vshrl.u32 %v356, 7
      %v358 = vsub.s32 0, %v357
      %v359 = vrot.slane %v332, %v358
      %v360 = vadd.f32 %v350, %v359
      %v361 = vadd.f32 %v354, %v359
      %vm362 = vcmp.gt.f32.partialorder %v360, 0.0
      %vm363 = vcmp.gt.f32.partialorder %v361, 0.0
      %v364 = vmul.f32 %v360, 0.2
      %v365 = vmul.f32 %v361, 0.2
      %v366 = vsel %vm362, %v360, %v364
      %v367 = vsel %vm363, %v361, %v365
      %v368 = vadd.f32 %v366, %v306
      %v369 = vadd.f32 %v367, %v307
      %v370 = vsel %vm222, %v368, -inf
      %371 = vmax.xlane.f32.xlu0 %v370
      %v372 = vpop.xlane.xlu0 %371
      %v373 = vsel %vm222, %v369, -inf
      %374 = vmax.xlane.f32.xlu0 %v373
      %v375 = vpop.xlane.xlu0 %374
      %v376 = vsub.f32 %v368, %v372
      %v377 = vsub.f32 %v369, %v375
      %v378 = vmul.f32 %v376, 1.442695
      %v379 = vpow.pop %v378
      %v380 = vmul.f32 %v377, 1.442695
      %v381 = vpow.pop %v380
      %v382 = vsel %vm222, %v379, 0.0
      %383 = vadd.xlane.f32.xlu0 %v382
      %v384 = vpop.xlane.xlu0 %383
      %v385 = vsel %vm222, %v381, 0.0
      %386 = vadd.xlane.f32.xlu0 %v385
      %v387 = vpop.xlane.xlu0 %386
      %v388 = vrcp.pop %v384
      %v389 = vrcp.pop %v387
      %v390 = vmul.f32 %v379, %v388
      %v391 = vmul.f32 %v381, %v389
      %v392 = vld [vmem:[%s2] sm:$0x1]
      %v394 = vlaneseq
      %v395 = vshrl.u32 %v394, 7
      %v396 = vsub.s32 0, %v395
      %v397 = vrot.slane %v392, %v396
      %v400 = vsel %vm222, %v390, 0
      %v403 = vsel %vm222, %v391, 0
      %405 = vmatprep.subr.mxu0 0.0
      %406 = vmatpush1.msra.mxu0 %v296
      %407 = vmatprep.subr.mxu0 0.0
      %408 = vmatpush1.msra.mxu0 %v301
      %409 = vmatprep.subr.mxu0 0.0
      %410 = vmatpush1.msra.mxu0 0.0
      %411 = vmatprep.subr.mxu0 0.0
      %412 = vmatpush1.msra.mxu0 0.0
      %413 = vmatprep.subr.mxu0 0.0
      %414 = vmatpush1.msra.mxu0 0.0
      %415 = vmatprep.subr.mxu0 0.0
      %416 = vmatpush1.msra.mxu0 0.0
      %417 = vmatprep.subr.mxu0 0.0
      %418 = vmatpush1.msra.mxu0 0.0
      %419 = vmatprep.subr.mxu0 0.0
      %420 = vmatpush1.msra.mxu0 0.0
      %421 = vmatprep.subr.mxu0 0.0
      %422 = vmatpush1.msra.mxu0 0.0
      %423 = vmatprep.subr.mxu0 0.0
      %424 = vmatpush1.msra.mxu0 0.0
      %425 = vmatprep.subr.mxu0 0.0
      %426 = vmatpush1.msra.mxu0 0.0
      %427 = vmatprep.subr.mxu0 0.0
      %428 = vmatpush1.msra.mxu0 0.0
      %429 = vmatprep.subr.mxu0 0.0
      %430 = vmatpush1.msra.mxu0 0.0
      %431 = vmatprep.subr.mxu0 0.0
      %432 = vmatpush1.msra.mxu0 0.0
      %433 = vmatprep.subr.mxu0 0.0
      %434 = vmatpush1.msra.mxu0 0.0
      %435 = vmatprep.subr.mxu0 0.0
      %436 = vmatpush1.msra.mxu0 0.0
      %437 = vmatprep.subr.mxu0 0.0
      %438 = vmatpush1.msra.mxu0 0.0
      %439 = vmatprep.subr.mxu0 0.0
      %440 = vmatpush1.msra.mxu0 0.0
      %441 = vmatprep.subr.mxu0 0.0
      %442 = vmatpush1.msra.mxu0 0.0
      %443 = vmatprep.subr.mxu0 0.0
      %444 = vmatpush1.msra.mxu0 0.0
      %445 = vmatprep.subr.mxu0 0.0
      %446 = vmatpush1.msra.mxu0 0.0
      %447 = vmatprep.subr.mxu0 0.0
      %448 = vmatpush1.msra.mxu0 0.0
      %449 = vmatprep.subr.mxu0 0.0
      %450 = vmatpush1.msra.mxu0 0.0
      %451 = vmatprep.subr.mxu0 0.0
      %452 = vmatpush1.msra.mxu0 0.0
      %453 = vmatprep.subr.mxu0 0.0
      %454 = vmatpush1.msra.mxu0 0.0
      %455 = vmatprep.subr.mxu0 0.0
      %456 = vmatpush1.msra.mxu0 0.0
      %457 = vmatprep.subr.mxu0 0.0
      %458 = vmatpush1.msra.mxu0 0.0
      %459 = vmatprep.subr.mxu0 0.0
      %460 = vmatpush1.msra.mxu0 0.0
      %461 = vmatprep.subr.mxu0 0.0
      %462 = vmatpush1.msra.mxu0 0.0
      %463 = vmatprep.subr.mxu0 0.0
      %464 = vmatpush1.msra.mxu0 0.0
      %465 = vmatprep.subr.mxu0 0.0
      %466 = vmatpush1.msra.mxu0 0.0
      %467 = vmatprep.subr.mxu0 0.0
      %468 = vmatpush1.msra.mxu0 0.0
      %469 = vmatprep.mubr.f32.mxu0 0.0
      %470 = vmatmul.mubr.f32.gmra.mrb[0].mxu0 %v400
      %v471 = vpop.f32.mrb[0].mxu0
      %v472 = vadd.f32 %v397, %v471
      %v473 = vpop.f32.mrb[0].mxu0
      %474 = vmatprep.mubr.f32.mxu0 0.0
      %475 = vmatmul.mubr.f32.gmra.mrb[0].mxu0 %v403
      %v476 = vpop.f32.mrb[0].mxu0
      %v477 = vadd.f32 %v397, %v476
      %v478 = vpop.f32.mrb[0].mxu0
      %479 = vdwg.mxu0
      %v480 = vmax.f32 %v472, 0.0
      %v481 = vmax.f32 %v477, 0.0
      %vm482 = vcmask 64512
      %483 = vst.msk [vmem:[%s217] sm:$0xff] %vm482, %v480
      %484 = vst.msk [vmem:[%s217 + $0x8] sm:$0xff] %vm482, %v481
      %v485 = vld [vmem:[%s217] sm:$0xff]
      %v486 = vld [vmem:[%s217 + $0x8] sm:$0xff]
      %v487 = vmul.f32 %v485, %v485
      %v488 = vmul.f32 %v486, %v486
      %v489 = vsel %vm482, %v487, 0.0
      %490 = vadd.xlane.f32.xlu0 %v489
      %v491 = vpop.xlane.xlu0 %490
      %v492 = vsel %vm482, %v488, 0.0
      %493 = vadd.xlane.f32.xlu0 %v492
      %v494 = vpop.xlane.xlu0 %493
      %v495 = vrsqrt.pop %v491
      %v496 = vmul.f32 %v491, %v495
      %vm497 = vcmp.eq.f32.partialorder %v491, inf
      %v498 = vsel %vm497, %v491, %v496
      %vm499 = vcmp.eq.f32.partialorder %v491, 0.0
      %v500 = vand.u32 %v491, 2147483648
      %v501 = vsel %vm499, %v500, %v498
      %v502 = vrsqrt.pop %v494
      %v503 = vmul.f32 %v494, %v502
      %vm504 = vcmp.eq.f32.partialorder %v494, inf
      %v505 = vsel %vm504, %v494, %v503
      %vm506 = vcmp.eq.f32.partialorder %v494, 0.0
      %v507 = vand.u32 %v494, 2147483648
      %v508 = vsel %vm506, %v507, %v505
      %v509 = vmax.f32 %v501, 1e-12
      %v510 = vmax.f32 %v508, 1e-12
      %v511 = vrcp.pop %v509
      %v512 = vmul.f32 %v485, %v511
      %v513 = vrcp.pop %v510
      %v514 = vmul.f32 %v486, %v513
      %515 = vst.msk [vmem:[%s217] sm:$0xff] %vm482, %v512
      %516 = vst.msk [vmem:[%s217 + $0x8] sm:$0xff] %vm482, %v514
      %p517 = scmp.lt.s32.totalorder %s15, 1
      %s518 = scalar_select %p517, %s15, 1
      %s519 = smul.addr %s518, 2
      %s520 = smul.addr %s519, 8
      %s521 = scalar_lea.vmem %s4, %s520
      // Predicated region
      $region37: #{gat_model_forward.3} parent=35 // pred_check
        %p522 = pneg %p127
      $region38: #{gat_model_forward.3} parent=35 // pred_check_branch
        %524 = sbr.rel (%p522) target = $region40
      $region39: #{gat_model_forward.3} parent=35 // pred_region
        _
      $region40: #{gat_model_forward.3} parent=35 // pred_fallthru
        _
    $region36: #{gat_model_forward.3} parent=5 // pred_fallthru
      _
    %p525 = scmp.le.s32.totalorder 2, %s10
    // Predicated region
    $region41: #{gat_model_forward.3} parent=5 // pred_check
      %p526 = pneg %p525
    $region42: #{gat_model_forward.3} parent=5 // pred_check_branch
      %528 = sbr.rel (%p526) target = $region44
    $region43: #{gat_model_forward.3} parent=5 // pred_region
      %s529 = ssub.s32 %s10, 2
      // Predicated region
      $region45: #{gat_model_forward.3} parent=43 // pred_check
        %p530 = pneg %p133
      $region46: #{gat_model_forward.3} parent=43 // pred_check_branch
        %532 = sbr.rel (%p530) target = $region48
      $region47: #{gat_model_forward.3} parent=43 // pred_region
        %p533 = scmp.lt.s32.totalorder %s16, 1
        %s534 = scalar_select %p533, %s16, 1
        %s535 = smul.addr %s534, 2
        %s536 = smul.addr %s535, 8
        %s537 = scalar_lea.vmem %s4, %s536
      $region48: #{gat_model_forward.3} parent=43 // pred_fallthru
        _
    $region44: #{gat_model_forward.3} parent=5 // pred_fallthru
      _
  $region6: #{gat_model_forward.3} parent=0 // loop_footer
    %s14 = sadd.s32 1, %s10
  $region7: #{gat_model_forward.3} parent=0 // loop_footer_branch
    %9 = sbr.rel target = $region3
  $region8: #{gat_model_forward.3} parent=0 // loop_exit
    _

// kernel: gat_model_forward.2
$region0: #{gat_model_forward.2}
  #allocation0 [shape = 'u32[]', space=smem, size = 0x4, offset = 0x4, fixed_abs, tag = 'smem constant byte address 0x4 - core index']
  #allocation1 [shape = 'u32[144,128]{1,0:T(1,128)}', space=vmem, size = 0x12000, scoped, tag = 'internal scratch']
  %s0 = inlined_call_operand.vmem [shape: f32[2,16,4], index: 0, kind: input, shape index: {}]
  %s1 = inlined_call_operand.vmem [shape: f32[4,20], index: 1, kind: input, shape index: {}]
  %s2 = inlined_call_operand.vmem [shape: f32[1,16], index: 2, kind: input, shape index: {}]
  %s3 = inlined_call_operand.vmem [shape: bf16[2,16,16], index: 3, kind: input, shape index: {}]
  %s4 = inlined_call_operand.vmem [shape: f32[2,16,16], index: 4, kind: output, shape index: {}]
  %s5 = sld [smem:[#allocation0]]
  $region49: #{gat_model_forward.2} parent=0
    _
  %s7 = ssub.s32 1, %s5
  %s8 = scalar_select 0, %s7, %s5
  loop: start=0, step=1, limit=4
  $region2: #{gat_model_forward.2} parent=0 // loop_pre_header
    _
  $region3: #{gat_model_forward.2} parent=0 // loop_header
    %s10 = sphi 0, %s14
    %p11 = scmp.ge.s32.totalorder %s10, 4
    %s20 = sphi 0, %s22
    %s23 = sphi 0, %s20
    %s24 = sphi 0, %s23
    %s40 = sphi 0, %s24
    %s44 = sphi 0, %s44
    %s46 = sphi 0, %s44
    %s47 = sphi 0, %s46
    %s61 = sphi 0, %s47
    %s65 = sphi 0, %s65
    %s67 = sphi 0, %s65
    %s68 = sphi 0, %s67
    %s82 = sphi 0, %s68
    %s88 = sphi 0, %s90
    %s91 = sphi 0, %s88
    %s92 = sphi 0, %s91
    %s108 = sphi 0, %s92
    %s114 = sphi 0, %s116
    %s117 = sphi 0, %s114
    %s118 = sphi 0, %s117
    %s134 = sphi 0, %s118
  $region4: #{gat_model_forward.2} parent=0 // loop_header_branch
    %13 = sbr.rel (%p11) target = $region8
  $region5: #{gat_model_forward.2} parent=0 // loop_body
    %s15 = ssub.s32 %s10, 1
    %s16 = ssub.s32 %s10, 2
    %s17 = sadd.s32 %s10, 1
    %s18 = ssub.s32 %s10, %s17
    %p19 = scmp.eq.s32.totalorder %s18, 0
    %s21 = sadd.s32 %s20, 1
    %s22 = scalar_select %p19, %s20, %s21
    %p25 = pneg %p19
    %p26 = scmp.eq.s32.totalorder %s10, 1
    %p27 = por %p25, %p26
    %p28 = scmp.ne.s32.totalorder %s20, %s23
    %p29 = scmp.eq.s32.totalorder %s10, 0
    %p30 = por %p28, %p29
    %p31 = scmp.ne.s32.totalorder %s20, %s23
    %p32 = scmp.eq.s32.totalorder %s15, 1
    %p33 = por %p31, %p32
    %p34 = scmp.ne.s32.totalorder %s23, %s24
    %p35 = scmp.eq.s32.totalorder %s15, 0
    %p36 = por %p34, %p35
    %p37 = scmp.ne.s32.totalorder %s23, %s24
    %p38 = scmp.eq.s32.totalorder %s16, 1
    %p39 = por %p37, %p38
    %p41 = scmp.ne.s32.totalorder %s24, %s40
    %p42 = scmp.eq.s32.totalorder %s16, 0
    %p43 = por %p41, %p42
    %s45 = sadd.s32 %s44, 1
    %p48 = scmp.eq.s32.totalorder %s10, 1
    %p49 = scmp.ne.s32.totalorder %s44, %s46
    %p50 = scmp.eq.s32.totalorder %s10, 0
    %p51 = por %p49, %p50
    %p52 = scmp.ne.s32.totalorder %s44, %s46
    %p53 = scmp.eq.s32.totalorder %s15, 1
    %p54 = por %p52, %p53
    %p55 = scmp.ne.s32.totalorder %s46, %s47
    %p56 = scmp.eq.s32.totalorder %s15, 0
    %p57 = por %p55, %p56
    %p58 = scmp.ne.s32.totalorder %s46, %s47
    %p59 = scmp.eq.s32.totalorder %s16, 1
    %p60 = por %p58, %p59
    %p62 = scmp.ne.s32.totalorder %s47, %s61
    %p63 = scmp.eq.s32.totalorder %s16, 0
    %p64 = por %p62, %p63
    %s66 = sadd.s32 %s65, 1
    %p69 = scmp.eq.s32.totalorder %s10, 1
    %p70 = scmp.ne.s32.totalorder %s65, %s67
    %p71 = scmp.eq.s32.totalorder %s10, 0
    %p72 = por %p70, %p71
    %p73 = scmp.ne.s32.totalorder %s65, %s67
    %p74 = scmp.eq.s32.totalorder %s15, 1
    %p75 = por %p73, %p74
    %p76 = scmp.ne.s32.totalorder %s67, %s68
    %p77 = scmp.eq.s32.totalorder %s15, 0
    %p78 = por %p76, %p77
    %p79 = scmp.ne.s32.totalorder %s67, %s68
    %p80 = scmp.eq.s32.totalorder %s16, 1
    %p81 = por %p79, %p80
    %p83 = scmp.ne.s32.totalorder %s68, %s82
    %p84 = scmp.eq.s32.totalorder %s16, 0
    %p85 = por %p83, %p84
    %s86 = ssub.s32 %s10, %s17
    %p87 = scmp.eq.s32.totalorder %s86, 0
    %s89 = sadd.s32 %s88, 1
    %s90 = scalar_select %p87, %s88, %s89
    %p93 = pneg %p87
    %p94 = scmp.eq.s32.totalorder %s10, 1
    %p95 = por %p93, %p94
    %p96 = scmp.ne.s32.totalorder %s88, %s91
    %p97 = scmp.eq.s32.totalorder %s10, 0
    %p98 = por %p96, %p97
    %p99 = scmp.ne.s32.totalorder %s88, %s91
    %p100 = scmp.eq.s32.totalorder %s15, 1
    %p101 = por %p99, %p100
    %p102 = scmp.ne.s32.totalorder %s91, %s92
    %p103 = scmp.eq.s32.totalorder %s15, 0
    %p104 = por %p102, %p103
    %p105 = scmp.ne.s32.totalorder %s91, %s92
    %p106 = scmp.eq.s32.totalorder %s16, 1
    %p107 = por %p105, %p106
    %p109 = scmp.ne.s32.totalorder %s92, %s108
    %p110 = scmp.eq.s32.totalorder %s16, 0
    %p111 = por %p109, %p110
    %s112 = ssub.s32 %s10, %s17
    %p113 = scmp.eq.s32.totalorder %s112, 0
    %s115 = sadd.s32 %s114, 1
    %s116 = scalar_select %p113, %s114, %s115
    %p119 = pneg %p113
    %p120 = scmp.eq.s32.totalorder %s10, 1
    %p121 = por %p119, %p120
    %p122 = scmp.ne.s32.totalorder %s114, %s117
    %p123 = scmp.eq.s32.totalorder %s10, 0
    %p124 = por %p122, %p123
    %p125 = scmp.ne.s32.totalorder %s114, %s117
    %p126 = scmp.eq.s32.totalorder %s15, 1
    %p127 = por %p125, %p126
    %p128 = scmp.ne.s32.totalorder %s117, %s118
    %p129 = scmp.eq.s32.totalorder %s15, 0
    %p130 = por %p128, %p129
    %p131 = scmp.ne.s32.totalorder %s117, %s118
    %p132 = scmp.eq.s32.totalorder %s16, 1
    %p133 = por %p131, %p132
    %p135 = scmp.ne.s32.totalorder %s118, %s134
    %p136 = scmp.eq.s32.totalorder %s16, 0
    %p137 = por %p135, %p136
    %p138 = scmp.le.s32.totalorder 1, %s10
    %p139 = scmp.lt.s32.totalorder %s10, 3
    %p140 = pnand %p138, %p139
    %p141 = pneg %p140
    // Predicated region
    $region9: #{gat_model_forward.2} parent=5 // pred_check
      _
    $region10: #{gat_model_forward.2} parent=5 // pred_check_branch
      %143 = sbr.rel (%p140) target = $region12
    $region11: #{gat_model_forward.2} parent=5 // pred_region
      %s144 = ssub.s32 %s10, 1
      // Predicated region
      $region13: #{gat_model_forward.2} parent=11 // pred_check
        %p145 = pneg %p57
      $region14: #{gat_model_forward.2} parent=11 // pred_check_branch
        %147 = sbr.rel (%p145) target = $region16
      $region15: #{gat_model_forward.2} parent=11 // pred_region
        _
      $region16: #{gat_model_forward.2} parent=11 // pred_fallthru
        _
      // Predicated region
      $region17: #{gat_model_forward.2} parent=11 // pred_check
        %p148 = pneg %p78
      $region18: #{gat_model_forward.2} parent=11 // pred_check_branch
        %150 = sbr.rel (%p148) target = $region20
      $region19: #{gat_model_forward.2} parent=11 // pred_region
        _
      $region20: #{gat_model_forward.2} parent=11 // pred_fallthru
        _
    $region12: #{gat_model_forward.2} parent=5 // pred_fallthru
      _
    %p151 = scmp.lt.s32.totalorder %s10, 2
    // Predicated region
    $region21: #{gat_model_forward.2} parent=5 // pred_check
      %p152 = pneg %p151
    $region22: #{gat_model_forward.2} parent=5 // pred_check_branch
      %154 = sbr.rel (%p152) target = $region24
    $region23: #{gat_model_forward.2} parent=5 // pred_region
      // Predicated region
      $region25: #{gat_model_forward.2} parent=23 // pred_check
        %p155 = pneg %p30
      $region26: #{gat_model_forward.2} parent=23 // pred_check_branch
        %157 = sbr.rel (%p155) target = $region28
      $region27: #{gat_model_forward.2} parent=23 // pred_region
        %p158 = scmp.lt.s32.totalorder %s10, 1
        %s159 = scalar_select %p158, %s10, 1
        %s160 = smul.addr %s159, 2
        %s161 = smul.addr %s160, 8
        %s162 = scalar_lea.vmem %s0, %s161
      $region28: #{gat_model_forward.2} parent=23 // pred_fallthru
        _
      // Predicated region
      $region29: #{gat_model_forward.2} parent=23 // pred_check
        %p163 = pneg %p98
      $region30: #{gat_model_forward.2} parent=23 // pred_check_branch
        %165 = sbr.rel (%p163) target = $region32
      $region31: #{gat_model_forward.2} parent=23 // pred_region
        %p166 = scmp.lt.s32.totalorder %s10, 1
        %s167 = scalar_select %p166, %s10, 1
        %s168 = smul.addr %s167, 2
        %s169 = smul.addr %s168, 4
        %s170 = scalar_lea.vmem %s3, %s169
      $region32: #{gat_model_forward.2} parent=23 // pred_fallthru
        _
    $region24: #{gat_model_forward.2} parent=5 // pred_fallthru
      _
    %p171 = scmp.le.s32.totalorder 1, %s10
    %p172 = scmp.lt.s32.totalorder %s10, 3
    %p173 = pnand %p171, %p172
    %p174 = pneg %p173
    // Predicated region
    $region33: #{gat_model_forward.2} parent=5 // pred_check
      _
    $region34: #{gat_model_forward.2} parent=5 // pred_check_branch
      %176 = sbr.rel (%p173) target = $region36
    $region35: #{gat_model_forward.2} parent=5 // pred_region
      %s177 = ssub.s32 %s10, 1
      %p178 = scmp.lt.s32.totalorder %s15, 1
      %s179 = scalar_select %p178, %s15, 1
      %s180 = smul.addr %s179, 2
      %s181 = smul.addr %s180, 8
      %s182 = scalar_lea.vmem %s0, %s181
      %p183 = pneg %p36
      %p184 = pneg %p33
      %p185 = pneg %p57
      %p186 = pneg %p54
      %p187 = pneg %p78
      %p188 = pneg %p75
      %p189 = scmp.lt.s32.totalorder %s15, 1
      %s190 = scalar_select %p189, %s15, 1
      %s191 = smul.addr %s190, 2
      %s192 = smul.addr %s191, 4
      %s193 = scalar_lea.vmem %s3, %s192
      %p194 = pneg %p104
      %p195 = pneg %p101
      %p196 = pneg %p130
      %p197 = pneg %p127
      %p198 = scmp.lt.s32.totalorder %s15, 1
      %s199 = scalar_select %p198, %s15, 1
      %s200 = smul.addr %s199, 2
      %s201 = smul.addr %s200, 8
      %s202 = scalar_lea.vmem %s4, %s201
      %p203 = scmp.lt.s32.totalorder %s15, 1
      %s204 = scalar_select %p203, %s15, 1
      %s205 = smul.addr %s204, 2
      %s206 = smul.addr %s205, 8
      %s207 = scalar_lea.vmem %s0, %s206
      %p208 = scmp.lt.s32.totalorder %s15, 1
      %s209 = scalar_select %p208, %s15, 1
      %s210 = smul.addr %s209, 2
      %s211 = smul.addr %s210, 4
      %s212 = scalar_lea.vmem %s3, %s211
      %p213 = scmp.lt.s32.totalorder %s15, 1
      %s214 = scalar_select %p213, %s15, 1
      %s215 = smul.addr %s214, 2
      %s216 = smul.addr %s215, 8
      %s217 = scalar_lea.vmem %s4, %s216
      %v218 = vld [vmem:[%s207] sm:$0xff]
      %v219 = vld [vmem:[%s207 + $0x8] sm:$0xff]
      %v220 = vld [vmem:[%s1] sm:$0xf]
      %vm221 = vcmask 31744
      %v223 = vsel %vm221, %v218, 0
      %v226 = vsel %vm221, %v219, 0
      %vm228 = vcmask 1043456
      %v230 = vsel %vm228, %v220, 0
      %232 = vmatprep.subr.mxu0 0.0
      %233 = vmatpush1.msra.mxu0 %v230
      %234 = vmatprep.subr.mxu0 0.0
      %235 = vmatpush1.msra.mxu0 0.0
      %236 = vmatprep.subr.mxu0 0.0
      %237 = vmatpush1.msra.mxu0 0.0
      %238 = vmatprep.subr.mxu0 0.0
      %239 = vmatpush1.msra.mxu0 0.0
      %240 = vmatprep.subr.mxu0 0.0
      %241 = vmatpush1.msra.mxu0 0.0
      %242 = vmatprep.subr.mxu0 0.0
      %243 = vmatpush1.msra.mxu0 0.0
      %244 = vmatprep.subr.mxu0 0.0
      %245 = vmatpush1.msra.mxu0 0.0
      %246 = vmatprep.subr.mxu0 0.0
      %247 = vmatpush1.msra.mxu0 0.0
      %248 = vmatprep.subr.mxu0 0.0
      %249 = vmatpush1.msra.mxu0 0.0
      %250 = vmatprep.subr.mxu0 0.0
      %251 = vmatpush1.msra.mxu0 0.0
      %252 = vmatprep.subr.mxu0 0.0
      %253 = vmatpush1.msra.mxu0 0.0
      %254 = vmatprep.subr.mxu0 0.0
      %255 = vmatpush1.msra.mxu0 0.0
      %256 = vmatprep.subr.mxu0 0.0
      %257 = vmatpush1.msra.mxu0 0.0
      %258 = vmatprep.subr.mxu0 0.0
      %259 = vmatpush1.msra.mxu0 0.0
      %260 = vmatprep.subr.mxu0 0.0
      %261 = vmatpush1.msra.mxu0 0.0
      %262 = vmatprep.subr.mxu0 0.0
      %263 = vmatpush1.msra.mxu0 0.0
      %264 = vmatprep.subr.mxu0 0.0
      %265 = vmatpush1.msra.mxu0 0.0
      %266 = vmatprep.subr.mxu0 0.0
      %267 = vmatpush1.msra.mxu0 0.0
      %268 = vmatprep.subr.mxu0 0.0
      %269 = vmatpush1.msra.mxu0 0.0
      %270 = vmatprep.subr.mxu0 0.0
      %271 = vmatpush1.msra.mxu0 0.0
      %272 = vmatprep.subr.mxu0 0.0
      %273 = vmatpush1.msra.mxu0 0.0
      %274 = vmatprep.subr.mxu0 0.0
      %275 = vmatpush1.msra.mxu0 0.0
      %276 = vmatprep.subr.mxu0 0.0
      %277 = vmatpush1.msra.mxu0 0.0
      %278 = vmatprep.subr.mxu0 0.0
      %279 = vmatpush1.msra.mxu0 0.0
      %280 = vmatprep.subr.mxu0 0.0
      %281 = vmatpush1.msra.mxu0 0.0
      %282 = vmatprep.subr.mxu0 0.0
      %283 = vmatpush1.msra.mxu0 0.0
      %284 = vmatprep.subr.mxu0 0.0
      %285 = vmatpush1.msra.mxu0 0.0
      %286 = vmatprep.subr.mxu0 0.0
      %287 = vmatpush1.msra.mxu0 0.0
      %288 = vmatprep.subr.mxu0 0.0
      %289 = vmatpush1.msra.mxu0 0.0
      %290 = vmatprep.subr.mxu0 0.0
      %291 = vmatpush1.msra.mxu0 0.0
      %292 = vmatprep.subr.mxu0 0.0
      %293 = vmatpush1.msra.mxu0 0.0
      %294 = vmatprep.subr.mxu0 0.0
      %295 = vmatpush1.msra.mxu0 0.0
      %296 = vmatprep.mubr.f32.mxu0 0.0
      %297 = vmatmul.mubr.f32.gmra.mrb[0].mxu0 %v223
      %v298 = vpop.f32.mrb[0].mxu0
      %v299 = vadd.f32 0.0, %v298
      %v300 = vpop.f32.mrb[0].mxu0
      %301 = vmatprep.mubr.f32.mxu0 0.0
      %302 = vmatmul.mubr.f32.gmra.mrb[0].mxu0 %v226
      %v303 = vpop.f32.mrb[0].mxu0
      %v304 = vadd.f32 0.0, %v303
      %v305 = vpop.f32.mrb[0].mxu0
      %306 = vdwg.mxu0
      %v307 = vld [vmem:[%s212] sm:$0xf]
      %v308 = vld [vmem:[%s212 + $0x4] sm:$0xf]
      %v309 = vunpack.c.l.bf16 %v307
      %v310 = vunpack.c.l.bf16 %v308
      %313 = vrot.lane.b32.xlu0 %v299, 112
      %v314 = vpop.permute.xlu0 %313
      %315 = vrot.lane.b32.xlu0 %v304, 112
      %v316 = vpop.permute.xlu0 %315
      %319 = vxpose.xlu0.b32.start [1/16] %v314, 128
      %320 = vxpose.xlu0.b32.cont [2/16] %v316, 128
      %321 = vxpose.xlu0.b32.cont [3/16] 0.0, 128
      %322 = vxpose.xlu0.b32.cont [4/16] 0.0, 128
      %323 = vxpose.xlu0.b32.cont [5/16] 0.0, 128
      %324 = vxpose.xlu0.b32.cont [6/16] 0.0, 128
      %325 = vxpose.xlu0.b32.cont [7/16] 0.0, 128
      %326 = vxpose.xlu0.b32.cont [8/16] 0.0, 128
      %327 = vxpose.xlu0.b32.cont [9/16] 0.0, 128
      %328 = vxpose.xlu0.b32.cont [10/16] 0.0, 128
      %329 = vxpose.xlu0.b32.cont [11/16] 0.0, 128
      %330 = vxpose.xlu0.b32.cont [12/16] 0.0, 128
      %331 = vxpose.xlu0.b32.cont [13/16] 0.0, 128
      %332 = vxpose.xlu0.b32.cont [14/16] 0.0, 128
      %333 = vxpose.xlu0.b32.cont [15/16] 0.0, 128
      %334 = vxpose.xlu0.b32.end [16/16] 0.0, 128
      %v335 = vpop.trf.xlu0
      %v336 = vpop.trf.xlu0
      %v337 = vpop.trf.xlu0
      %v338 = vpop.trf.xlu0
      %v339 = vpop.trf.xlu0
      %v340 = vpop.trf.xlu0
      %v341 = vpop.trf.xlu0
      %v342 = vpop.trf.xlu0
      %v343 = vpop.trf.xlu0
      %v344 = vpop.trf.xlu0
      %v345 = vpop.trf.xlu0
      %v346 = vpop.trf.xlu0
      %v347 = vpop.trf.xlu0
      %v348 = vpop.trf.xlu0
      %v349 = vpop.trf.xlu0
      %v350 = vpop.trf.xlu0
      %351 = vset.pattern.permute.xlu0 18
      %352 = vperm.xlu0 %351, %v299
      %v353 = vpop.permute.xlu0 %352
      %355 = vset.pattern.permute.xlu0 18
      %356 = vperm.xlu0 %355, %v304
      %v357 = vpop.permute.xlu0 %356
      %v359 = vlaneseq
      %v360 = vshrl.u32 %v359, 7
      %v361 = vsub.s32 0, %v360
      %v362 = vrot.slane %v335, %v361
      %v363 = vadd.f32 %v353, %v362
      %v364 = vadd.f32 %v357, %v362
      %vm365 = vcmp.gt.f32.partialorder %v363, 0.0
      %vm366 = vcmp.gt.f32.partialorder %v364, 0.0
      %v367 = vmul.f32 %v363, 0.2
      %v368 = vmul.f32 %v364, 0.2
      %v369 = vsel %vm365, %v363, %v367
      %v370 = vsel %vm366, %v364, %v368
      %v371 = vadd.f32 %v369, %v309
      %v372 = vadd.f32 %v370, %v310
      %vm373 = vcmask 130048
      %v374 = vsel %vm373, %v371, -inf
      %375 = vmax.xlane.f32.xlu0 %v374
      %v376 = vpop.xlane.xlu0 %375
      %v377 = vsel %vm373, %v372, -inf
      %378 = vmax.xlane.f32.xlu0 %v377
      %v379 = vpop.xlane.xlu0 %378
      %v380 = vsub.f32 %v371, %v376
      %v381 = vsub.f32 %v372, %v379
      %v382 = vmul.f32 %v380, 1.442695
      %v383 = vpow.pop %v382
      %v384 = vmul.f32 %v381, 1.442695
      %v385 = vpow.pop %v384
      %v386 = vsel %vm373, %v383, 0.0
      %387 = vadd.xlane.f32.xlu0 %v386
      %v388 = vpop.xlane.xlu0 %387
      %v389 = vsel %vm373, %v385, 0.0
      %390 = vadd.xlane.f32.xlu0 %v389
      %v391 = vpop.xlane.xlu0 %390
      %v392 = vrcp.pop %v388
      %v393 = vrcp.pop %v391
      %v394 = vmul.f32 %v383, %v392
      %v395 = vmul.f32 %v385, %v393
      %v396 = vld [vmem:[%s2] sm:$0x1]
      %v398 = vlaneseq
      %v399 = vshrl.u32 %v398, 7
      %v400 = vsub.s32 0, %v399
      %v401 = vrot.slane %v396, %v400
      %v404 = vsel %vm373, %v394, 0
      %v407 = vsel %vm373, %v395, 0
      %409 = vmatprep.subr.mxu0 0.0
      %410 = vmatpush1.msra.mxu0 %v299
      %411 = vmatprep.subr.mxu0 0.0
      %412 = vmatpush1.msra.mxu0 %v304
      %413 = vmatprep.subr.mxu0 0.0
      %414 = vmatpush1.msra.mxu0 0.0
      %415 = vmatprep.subr.mxu0 0.0
      %416 = vmatpush1.msra.mxu0 0.0
      %417 = vmatprep.subr.mxu0 0.0
      %418 = vmatpush1.msra.mxu0 0.0
      %419 = vmatprep.subr.mxu0 0.0
      %420 = vmatpush1.msra.mxu0 0.0
      %421 = vmatprep.subr.mxu0 0.0
      %422 = vmatpush1.msra.mxu0 0.0
      %423 = vmatprep.subr.mxu0 0.0
      %424 = vmatpush1.msra.mxu0 0.0
      %425 = vmatprep.subr.mxu0 0.0
      %426 = vmatpush1.msra.mxu0 0.0
      %427 = vmatprep.subr.mxu0 0.0
      %428 = vmatpush1.msra.mxu0 0.0
      %429 = vmatprep.subr.mxu0 0.0
      %430 = vmatpush1.msra.mxu0 0.0
      %431 = vmatprep.subr.mxu0 0.0
      %432 = vmatpush1.msra.mxu0 0.0
      %433 = vmatprep.subr.mxu0 0.0
      %434 = vmatpush1.msra.mxu0 0.0
      %435 = vmatprep.subr.mxu0 0.0
      %436 = vmatpush1.msra.mxu0 0.0
      %437 = vmatprep.subr.mxu0 0.0
      %438 = vmatpush1.msra.mxu0 0.0
      %439 = vmatprep.subr.mxu0 0.0
      %440 = vmatpush1.msra.mxu0 0.0
      %441 = vmatprep.subr.mxu0 0.0
      %442 = vmatpush1.msra.mxu0 0.0
      %443 = vmatprep.subr.mxu0 0.0
      %444 = vmatpush1.msra.mxu0 0.0
      %445 = vmatprep.subr.mxu0 0.0
      %446 = vmatpush1.msra.mxu0 0.0
      %447 = vmatprep.subr.mxu0 0.0
      %448 = vmatpush1.msra.mxu0 0.0
      %449 = vmatprep.subr.mxu0 0.0
      %450 = vmatpush1.msra.mxu0 0.0
      %451 = vmatprep.subr.mxu0 0.0
      %452 = vmatpush1.msra.mxu0 0.0
      %453 = vmatprep.subr.mxu0 0.0
      %454 = vmatpush1.msra.mxu0 0.0
      %455 = vmatprep.subr.mxu0 0.0
      %456 = vmatpush1.msra.mxu0 0.0
      %457 = vmatprep.subr.mxu0 0.0
      %458 = vmatpush1.msra.mxu0 0.0
      %459 = vmatprep.subr.mxu0 0.0
      %460 = vmatpush1.msra.mxu0 0.0
      %461 = vmatprep.subr.mxu0 0.0
      %462 = vmatpush1.msra.mxu0 0.0
      %463 = vmatprep.subr.mxu0 0.0
      %464 = vmatpush1.msra.mxu0 0.0
      %465 = vmatprep.subr.mxu0 0.0
      %466 = vmatpush1.msra.mxu0 0.0
      %467 = vmatprep.subr.mxu0 0.0
      %468 = vmatpush1.msra.mxu0 0.0
      %469 = vmatprep.subr.mxu0 0.0
      %470 = vmatpush1.msra.mxu0 0.0
      %471 = vmatprep.subr.mxu0 0.0
      %472 = vmatpush1.msra.mxu0 0.0
      %473 = vmatprep.mubr.f32.mxu0 0.0
      %474 = vmatmul.mubr.f32.gmra.mrb[0].mxu0 %v404
      %v475 = vpop.f32.mrb[0].mxu0
      %v476 = vadd.f32 %v401, %v475
      %v477 = vpop.f32.mrb[0].mxu0
      %478 = vmatprep.mubr.f32.mxu0 0.0
      %479 = vmatmul.mubr.f32.gmra.mrb[0].mxu0 %v407
      %v480 = vpop.f32.mrb[0].mxu0
      %v481 = vadd.f32 %v401, %v480
      %v482 = vpop.f32.mrb[0].mxu0
      %483 = vdwg.mxu0
      %v484 = vmax.f32 %v476, 0.0
      %v485 = vmax.f32 %v481, 0.0
      %vm486 = vcmask 64512
      %487 = vst.msk [vmem:[%s217] sm:$0xff] %vm486, %v484
      %488 = vst.msk [vmem:[%s217 + $0x8] sm:$0xff] %vm486, %v485
      %489 = vrot.lane.b32.xlu0 %v299, 111
      %v490 = vpop.permute.xlu0 %489
      %491 = vrot.lane.b32.xlu0 %v304, 111
      %v492 = vpop.permute.xlu0 %491
      %495 = vxpose.xlu0.b32.start [1/16] %v490, 128
      %496 = vxpose.xlu0.b32.cont [2/16] %v492, 128
      %497 = vxpose.xlu0.b32.cont [3/16] 0.0, 128
      %498 = vxpose.xlu0.b32.cont [4/16] 0.0, 128
      %499 = vxpose.xlu0.b32.cont [5/16] 0.0, 128
      %500 = vxpose.xlu0.b32.cont [6/16] 0.0, 128
      %501 = vxpose.xlu0.b32.cont [7/16] 0.0, 128
      %502 = vxpose.xlu0.b32.cont [8/16] 0.0, 128
      %503 = vxpose.xlu0.b32.cont [9/16] 0.0, 128
      %504 = vxpose.xlu0.b32.cont [10/16] 0.0, 128
      %505 = vxpose.xlu0.b32.cont [11/16] 0.0, 128
      %506 = vxpose.xlu0.b32.cont [12/16] 0.0, 128
      %507 = vxpose.xlu0.b32.cont [13/16] 0.0, 128
      %508 = vxpose.xlu0.b32.cont [14/16] 0.0, 128
      %509 = vxpose.xlu0.b32.cont [15/16] 0.0, 128
      %510 = vxpose.xlu0.b32.end [16/16] 0.0, 128
      %v511 = vpop.trf.xlu0
      %v512 = vpop.trf.xlu0
      %v513 = vpop.trf.xlu0
      %v514 = vpop.trf.xlu0
      %v515 = vpop.trf.xlu0
      %v516 = vpop.trf.xlu0
      %v517 = vpop.trf.xlu0
      %v518 = vpop.trf.xlu0
      %v519 = vpop.trf.xlu0
      %v520 = vpop.trf.xlu0
      %v521 = vpop.trf.xlu0
      %v522 = vpop.trf.xlu0
      %v523 = vpop.trf.xlu0
      %v524 = vpop.trf.xlu0
      %v525 = vpop.trf.xlu0
      %v526 = vpop.trf.xlu0
      %527 = vset.pattern.permute.xlu0 19
      %528 = vperm.xlu0 %527, %v299
      %v529 = vpop.permute.xlu0 %528
      %531 = vset.pattern.permute.xlu0 19
      %532 = vperm.xlu0 %531, %v304
      %v533 = vpop.permute.xlu0 %532
      %v535 = vlaneseq
      %v536 = vshrl.u32 %v535, 7
      %v537 = vsub.s32 0, %v536
      %v538 = vrot.slane %v511, %v537
      %v539 = vadd.f32 %v529, %v538
      %v540 = vadd.f32 %v533, %v538
      %vm541 = vcmp.gt.f32.partialorder %v539, 0.0
      %vm542 = vcmp.gt.f32.partialorder %v540, 0.0
      %v543 = vmul.f32 %v539, 0.2
      %v544 = vmul.f32 %v540, 0.2
      %v545 = vsel %vm541, %v539, %v543
      %v546 = vsel %vm542, %v540, %v544
      %v547 = vadd.f32 %v545, %v309
      %v548 = vadd.f32 %v546, %v310
      %v549 = vsel %vm373, %v547, -inf
      %550 = vmax.xlane.f32.xlu0 %v549
      %v551 = vpop.xlane.xlu0 %550
      %v552 = vsel %vm373, %v548, -inf
      %553 = vmax.xlane.f32.xlu0 %v552
      %v554 = vpop.xlane.xlu0 %553
      %v555 = vsub.f32 %v547, %v551
      %v556 = vsub.f32 %v548, %v554
      %v557 = vmul.f32 %v555, 1.442695
      %v558 = vpow.pop %v557
      %v559 = vmul.f32 %v556, 1.442695
      %v560 = vpow.pop %v559
      %v561 = vsel %vm373, %v558, 0.0
      %562 = vadd.xlane.f32.xlu0 %v561
      %v563 = vpop.xlane.xlu0 %562
      %v564 = vsel %vm373, %v560, 0.0
      %565 = vadd.xlane.f32.xlu0 %v564
      %v566 = vpop.xlane.xlu0 %565
      %v567 = vrcp.pop %v563
      %v568 = vrcp.pop %v566
      %v569 = vmul.f32 %v558, %v567
      %v570 = vmul.f32 %v560, %v568
      %v571 = vld [vmem:[%s2] sm:$0x1]
      %v573 = vlaneseq
      %v574 = vshrl.u32 %v573, 7
      %v575 = vsub.s32 0, %v574
      %v576 = vrot.slane %v571, %v575
      %577 = vrot.lane.b32.xlu0 %v299, 120
      %v578 = vpop.permute.xlu0 %577
      %579 = vrot.lane.b32.xlu0 %v304, 120
      %v580 = vpop.permute.xlu0 %579
      %583 = vrot.lane.b32.xlu0 %v576, 120
      %v584 = vpop.permute.xlu0 %583
      %v587 = vsel %vm373, %v569, 0
      %v590 = vsel %vm373, %v570, 0
      %592 = vmatprep.subr.mxu0 0.0
      %593 = vmatpush1.msra.mxu0 %v578
      %594 = vmatprep.subr.mxu0 0.0
      %595 = vmatpush1.msra.mxu0 %v580
      %596 = vmatprep.subr.mxu0 0.0
      %597 = vmatpush1.msra.mxu0 0.0
      %598 = vmatprep.subr.mxu0 0.0
      %599 = vmatpush1.msra.mxu0 0.0
      %600 = vmatprep.subr.mxu0 0.0
      %601 = vmatpush1.msra.mxu0 0.0
      %602 = vmatprep.subr.mxu0 0.0
      %603 = vmatpush1.msra.mxu0 0.0
      %604 = vmatprep.subr.mxu0 0.0
      %605 = vmatpush1.msra.mxu0 0.0
      %606 = vmatprep.subr.mxu0 0.0
      %607 = vmatpush1.msra.mxu0 0.0
      %608 = vmatprep.subr.mxu0 0.0
      %609 = vmatpush1.msra.mxu0 0.0
      %610 = vmatprep.subr.mxu0 0.0
      %611 = vmatpush1.msra.mxu0 0.0
      %612 = vmatprep.subr.mxu0 0.0
      %613 = vmatpush1.msra.mxu0 0.0
      %614 = vmatprep.subr.mxu0 0.0
      %615 = vmatpush1.msra.mxu0 0.0
      %616 = vmatprep.subr.mxu0 0.0
      %617 = vmatpush1.msra.mxu0 0.0
      %618 = vmatprep.subr.mxu0 0.0
      %619 = vmatpush1.msra.mxu0 0.0
      %620 = vmatprep.subr.mxu0 0.0
      %621 = vmatpush1.msra.mxu0 0.0
      %622 = vmatprep.subr.mxu0 0.0
      %623 = vmatpush1.msra.mxu0 0.0
      %624 = vmatprep.subr.mxu0 0.0
      %625 = vmatpush1.msra.mxu0 0.0
      %626 = vmatprep.subr.mxu0 0.0
      %627 = vmatpush1.msra.mxu0 0.0
      %628 = vmatprep.subr.mxu0 0.0
      %629 = vmatpush1.msra.mxu0 0.0
      %630 = vmatprep.subr.mxu0 0.0
      %631 = vmatpush1.msra.mxu0 0.0
      %632 = vmatprep.subr.mxu0 0.0
      %633 = vmatpush1.msra.mxu0 0.0
      %634 = vmatprep.subr.mxu0 0.0
      %635 = vmatpush1.msra.mxu0 0.0
      %636 = vmatprep.subr.mxu0 0.0
      %637 = vmatpush1.msra.mxu0 0.0
      %638 = vmatprep.subr.mxu0 0.0
      %639 = vmatpush1.msra.mxu0 0.0
      %640 = vmatprep.subr.mxu0 0.0
      %641 = vmatpush1.msra.mxu0 0.0
      %642 = vmatprep.subr.mxu0 0.0
      %643 = vmatpush1.msra.mxu0 0.0
      %644 = vmatprep.subr.mxu0 0.0
      %645 = vmatpush1.msra.mxu0 0.0
      %646 = vmatprep.subr.mxu0 0.0
      %647 = vmatpush1.msra.mxu0 0.0
      %648 = vmatprep.subr.mxu0 0.0
      %649 = vmatpush1.msra.mxu0 0.0
      %650 = vmatprep.subr.mxu0 0.0
      %651 = vmatpush1.msra.mxu0 0.0
      %652 = vmatprep.subr.mxu0 0.0
      %653 = vmatpush1.msra.mxu0 0.0
      %654 = vmatprep.subr.mxu0 0.0
      %655 = vmatpush1.msra.mxu0 0.0
      %656 = vmatprep.mubr.f32.mxu0 0.0
      %657 = vmatmul.mubr.f32.gmra.mrb[0].mxu0 %v587
      %v658 = vpop.f32.mrb[0].mxu0
      %v659 = vadd.f32 %v584, %v658
      %v660 = vpop.f32.mrb[0].mxu0
      %661 = vmatprep.mubr.f32.mxu0 0.0
      %662 = vmatmul.mubr.f32.gmra.mrb[0].mxu0 %v590
      %v663 = vpop.f32.mrb[0].mxu0
      %v664 = vadd.f32 %v584, %v663
      %v665 = vpop.f32.mrb[0].mxu0
      %666 = vdwg.mxu0
      %v667 = vmax.f32 %v659, 0.0
      %v668 = vmax.f32 %v664, 0.0
      %671 = vrot.lane.b32.xlu0 %v667, 8
      %v672 = vpop.permute.xlu0 %671
      %673 = vrot.lane.b32.xlu0 %v668, 8
      %v674 = vpop.permute.xlu0 %673
      %vm677 = vcmask 130112
      %678 = vst.msk [vmem:[%s217] sm:$0xff] %vm677, %v672
      %679 = vst.msk [vmem:[%s217 + $0x8] sm:$0xff] %vm677, %v674
      %p680 = scmp.lt.s32.totalorder %s15, 1
      %s681 = scalar_select %p680, %s15, 1
      %s682 = smul.addr %s681, 2
      %s683 = smul.addr %s682, 8
      %s684 = scalar_lea.vmem %s4, %s683
      // Predicated region
      $region37: #{gat_model_forward.2} parent=35 // pred_check
        %p685 = pneg %p127
      $region38: #{gat_model_forward.2} parent=35 // pred_check_branch
        %687 = sbr.rel (%p685) target = $region40
      $region39: #{gat_model_forward.2} parent=35 // pred_region
        _
      $region40: #{gat_model_forward.2} parent=35 // pred_fallthru
        _
    $region36: #{gat_model_forward.2} parent=5 // pred_fallthru
      _
    %p688 = scmp.le.s32.totalorder 2, %s10
    // Predicated region
    $region41: #{gat_model_forward.2} parent=5 // pred_check
      %p689 = pneg %p688
    $region42: #{gat_model_forward.2} parent=5 // pred_check_branch
      %691 = sbr.rel (%p689) target = $region44
    $region43: #{gat_model_forward.2} parent=5 // pred_region
      %s692 = ssub.s32 %s10, 2
      // Predicated region
      $region45: #{gat_model_forward.2} parent=43 // pred_check
        %p693 = pneg %p133
      $region46: #{gat_model_forward.2} parent=43 // pred_check_branch
        %695 = sbr.rel (%p693) target = $region48
      $region47: #{gat_model_forward.2} parent=43 // pred_region
        %p696 = scmp.lt.s32.totalorder %s16, 1
        %s697 = scalar_select %p696, %s16, 1
        %s698 = smul.addr %s697, 2
        %s699 = smul.addr %s698, 8
        %s700 = scalar_lea.vmem %s4, %s699
      $region48: #{gat_model_forward.2} parent=43 // pred_fallthru
        _
    $region44: #{gat_model_forward.2} parent=5 // pred_fallthru
      _
  $region6: #{gat_model_forward.2} parent=0 // loop_footer
    %s14 = sadd.s32 1, %s10
  $region7: #{gat_model_forward.2} parent=0 // loop_footer_branch
    %9 = sbr.rel target = $region3
  $region8: #{gat_model_forward.2} parent=0 // loop_exit
    _

</llo_original>
